<compile_context>
chip_gen: v7x
topology: tpu7x:2x2x1
jax: 0.10.0
libtpu: 0.0.40
codegen_flags: <defaults>
</compile_context>

<pallas_src>
import jax
import jax.numpy as jnp
from jax import lax
from jax.experimental import pallas as pl
from jax.experimental.pallas import tpu as pltpu

_EPS = 1e-12    # torch.nn.functional.normalize eps
_NEG = -1e30    # bias for padded (fake) classes -> softmax mass exactly 0


def _round_up(v, m):
    return (v + m - 1) // m * m


def _l2_normalize(x):
    # == x / max(||x||_2, eps), one rsqrt instead of sqrt + divide.
    sumsq = jnp.sum(x * x, axis=-1, keepdims=True)
    return x * lax.rsqrt(jnp.maximum(sumsq, _EPS * _EPS))


# ---------------------------------------------------------------------------
# Layer 1: mean-aggregate (K-blocked) -> lin_l + lin_r -> l2norm -> ReLU,
# plus the pre-projection t = h1 @ Wl2 used by the reassociated layer 2.
# ---------------------------------------------------------------------------
def _layer1_kernel(a_ref, xs_ref, xd_ref, dinv_ref, wl1_ref, bl1_ref, wr1_ref,
                   wl2_ref, h1_ref, t_ref, acc_ref):
    k = pl.program_id(1)

    @pl.when(k == 0)
    def _():
        acc_ref[...] = jnp.zeros_like(acc_ref)

    # (tm, tk) bf16 @ (tk, f_in) bf16 -> f32 accumulate (native bf16 MXU path).
    acc_ref[...] += jnp.dot(a_ref[...], xs_ref[...],
                            preferred_element_type=jnp.float32)

    @pl.when(k == pl.num_programs(1) - 1)
    def _():
        agg = acc_ref[...] * dinv_ref[...]                       # mean aggregation
        h1 = (jnp.dot(agg, wl1_ref[...], preferred_element_type=jnp.float32)
              + bl1_ref[...]
              + jnp.dot(xd_ref[...], wr1_ref[...],
                        preferred_element_type=jnp.float32))
        h1 = jnp.maximum(_l2_normalize(h1), 0.0)                 # normalize, then ReLU
        h1_ref[...] = h1
        # Pre-project for layer 2: A @ (h1 @ Wl2) needs only N^2*out MACs later.
        t_ref[...] = jnp.dot(h1, wl2_ref[...],
                             preferred_element_type=jnp.float32).astype(t_ref.dtype)


# ---------------------------------------------------------------------------
# Layer 2 (reassociated, K-blocked) + fc + softmax, lane-dense padded output.
# ---------------------------------------------------------------------------
def _layer2_kernel(a_ref, t_ref, h1_ref, dinv_ref, bl2_ref, wr2_ref,
                   wfc_ref, bfc_ref, out_ref, acc_ref):
    k = pl.program_id(1)

    @pl.when(k == 0)
    def _():
        acc_ref[...] = jnp.zeros_like(acc_ref)

    # (tm, tk) bf16 @ (tk, out_sz) bf16 -> f32 accumulate.
    acc_ref[...] += jnp.dot(a_ref[...], t_ref[...],
                            preferred_element_type=jnp.float32)

    @pl.when(k == pl.num_programs(1) - 1)
    def _():
        # (A @ (h1 @ Wl2)) * dinv  ==  ((A @ h1) * dinv) @ Wl2  (dinv is a row scale)
        agg = acc_ref[...] * dinv_ref[...]
        h2 = (agg + bl2_ref[...]
              + jnp.dot(h1_ref[...], wr2_ref[...],
                        preferred_element_type=jnp.float32))
        h2 = _l2_normalize(h2)

        # fc (classes padded to 128 lanes, padded lanes carry -1e30 bias) + softmax.
        logits = (jnp.dot(h2, wfc_ref[...], preferred_element_type=jnp.float32)
                  + bfc_ref[...])
        m = jnp.max(logits, axis=-1, keepdims=True)
        e = jnp.exp(logits - m)
        out_ref[...] = e / jnp.sum(e, axis=-1, keepdims=True)   # exact normalization


# ---------------------------------------------------------------------------
# Wrapper
# ---------------------------------------------------------------------------
def graphsage_forward(x, edge_index, params, *, tm=256, tk=2048):
    """x: (N, F_in) float32; edge_index: (2, E) int32 [src; dst]."""
    N, f_in = x.shape
    wl1, bl1, wr1, wl2, bl2, wr2, wfc, bfc = params
    hidden = wl1.shape[1]
    out_sz = wl2.shape[1]
    n_cls = wfc.shape[1]

    # Tile sizes: 128-aligned, clamped to the graph, with tk a multiple of tm so
    # a single padded size n_pad divides evenly into both grid axes.
    tm = max(128, min(_round_up(tm, 128), _round_up(N, 128)))
    tk = max(tm, min(_round_up(tk, 128), _round_up(N, 128)))
    tk = (tk // tm) * tm
    n_pad = _round_up(N, tk)
    pad = n_pad - N

    # Dense adjacency built directly as padded bf16: A[dst, src] += 1.
    # Edge multiplicities <= 256 stay exact in bf16; degree summed in f32.
    # TODO(synk): for large sparse graphs, replace the dense O(N^2) adjacency
    # with CSR neighbor lists gathered via PrefetchScalarGridSpec scalar prefetch.
    src, dst = edge_index[0], edge_index[1]
    a = jnp.zeros((n_pad, n_pad), jnp.bfloat16).at[dst, src].add(
        jnp.ones(src.shape, jnp.bfloat16))
    deg = jnp.sum(a, axis=1, keepdims=True, dtype=jnp.float32)
    dinv = jnp.where(deg > 0.0, 1.0 / deg, 0.0)

    xp = jnp.pad(x, ((0, pad), (0, 0)))
    x_src = xp.astype(jnp.bfloat16)   # streamed source features for the bf16 A @ x
    x_dst = xp                        # f32 destination features for lin_r (exact)

    # Lane-dense fc: pad classes to a multiple of 128 (>= 128).
    c_pad = max(128, _round_up(n_cls, 128))
    wfc_p = jnp.pad(wfc, ((0, 0), (0, c_pad - n_cls)))
    bfc_p = jnp.concatenate(
        [bfc.astype(jnp.float32),
         jnp.full((1, c_pad - n_cls), _NEG, jnp.float32)], axis=1)

    grid = (n_pad // tm, n_pad // tk)   # rows (parallel) outer, K (arbitrary) last

    def rowtile(c):
        return pl.BlockSpec((tm, c), lambda i, k: (i, 0))

    def ktile(c):
        return pl.BlockSpec((tk, c), lambda i, k: (k, 0))

    def resident(r, c):
        return pl.BlockSpec((r, c), lambda i, k: (0, 0))

    a_spec = pl.BlockSpec((tm, tk), lambda i, k: (i, k))   # streamed bf16 A tile

    cparams = pltpu.CompilerParams(
        dimension_semantics=("parallel", "arbitrary"))     # 2 TCs on v7x; K is reduction

    # ---- pass 1: layer-1 SAGEConv (+ Wl2 pre-projection) ----
    h1, t = pl.pallas_call(
        _layer1_kernel,
        grid=grid,
        in_specs=[
            a_spec,                      # A (tm, tk) bf16, streamed
            ktile(f_in),                 # x source block (tk, f_in) bf16
            rowtile(f_in),               # x dest rows (tm, f_in) f32 for lin_r
            rowtile(1),                  # 1/deg row tile
            resident(f_in, hidden),      # Wl1
            resident(1, hidden),         # bl1
            resident(f_in, hidden),      # Wr1
            resident(hidden, out_sz),    # Wl2 (pre-projection)
        ],
        out_specs=[rowtile(hidden), rowtile(out_sz)],
        out_shape=[jax.ShapeDtypeStruct((n_pad, hidden), jnp.float32),
                   jax.ShapeDtypeStruct((n_pad, out_sz), jnp.bfloat16)],
        scratch_shapes=[pltpu.VMEM((tm, f_in), jnp.float32)],
        compiler_params=cparams,
    )(a, x_src, x_dst, dinv, wl1, bl1, wr1, wl2)

    # ---- pass 2: layer-2 SAGEConv (reassociated) + fc + softmax ----
    out_p = pl.pallas_call(
        _layer2_kernel,
        grid=grid,
        in_specs=[
            a_spec,                      # A (tm, tk) bf16, streamed
            ktile(out_sz),               # t = h1 @ Wl2 source block (tk, out_sz) bf16
            rowtile(hidden),             # h1 dest rows (tm, hidden) f32 for lin_r
            rowtile(1),                  # 1/deg row tile
            resident(1, out_sz),         # bl2
            resident(hidden, out_sz),    # Wr2
            resident(out_sz, c_pad),     # Wfc (lane-padded)
            resident(1, c_pad),          # bfc (lane-padded, -1e30 on pads)
        ],
        out_specs=rowtile(c_pad),
        out_shape=jax.ShapeDtypeStruct((n_pad, c_pad), jnp.float32),
        scratch_shapes=[pltpu.VMEM((tm, out_sz), jnp.float32)],
        compiler_params=cparams,
    )(a, t, h1, dinv, bl2, wr2, wfc_p, bfc_p)

    return out_p[:N, :n_cls]


# ---------------------------------------------------------------------------
# Parameters (torch xavier_uniform on (out, in) weights, zero biases),
# stored pre-transposed to (in, out) for the kernel's `x @ W` convention.
# ---------------------------------------------------------------------------
def _xavier_uniform(key, fan_in, fan_out):
    bound = (6.0 / (fan_in + fan_out)) ** 0.5
    w = jax.random.uniform(key, (fan_out, fan_in), jnp.float32, -bound, bound)
    return w.T


def make_params(key, in_size, hidden_size, out_size, num_classes=2):
    ks = jax.random.split(key, 5)
    wl1 = _xavier_uniform(ks[0], in_size, hidden_size)        # conv1.lin_l
    bl1 = jnp.zeros((1, hidden_size), jnp.float32)
    wr1 = _xavier_uniform(ks[1], in_size, hidden_size)        # conv1.lin_r (no bias)
    wl2 = _xavier_uniform(ks[2], hidden_size, out_size)       # conv2.lin_l
    bl2 = jnp.zeros((1, out_size), jnp.float32)
    wr2 = _xavier_uniform(ks[3], hidden_size, out_size)       # conv2.lin_r (no bias)
    wfc = _xavier_uniform(ks[4], out_size, num_classes)       # fc
    bfc = jnp.zeros((1, num_classes), jnp.float32)
    return (wl1, bl1, wr1, wl2, bl2, wr2, wfc, bfc)


# Pure-JAX f32 reference (original association, exact divides) for verification.
def graphsage_reference(x, edge_index, params):
    wl1, bl1, wr1, wl2, bl2, wr2, wfc, bfc = params
    N = x.shape[0]
    src, dst = edge_index[0], edge_index[1]
    A = jnp.zeros((N, N), jnp.float32).at[dst, src].add(1.0)
    deg = jnp.sum(A, axis=1, keepdims=True)
    dinv = jnp.where(deg > 0, 1.0 / deg, 0.0)

    def l2n(v):
        n = jnp.sqrt(jnp.sum(v * v, axis=-1, keepdims=True))
        return v / jnp.maximum(n, _EPS)

    h1 = jnp.maximum(l2n(((A @ x) * dinv) @ wl1 + bl1 + x @ wr1), 0.0)
    h2 = l2n(((A @ h1) * dinv) @ wl2 + bl2 + h1 @ wr2)
    return jax.nn.softmax(h2 @ wfc + bfc, axis=-1)


if __name__ == "__main__":
    key = jax.random.PRNGKey(0)
    k_feat, k_edge, k_param = jax.random.split(key, 3)

    N, E = 256, 1024
    in_size, hidden_size, out_size = 8, 32, 16

    x = jax.random.normal(k_feat, (N, in_size), jnp.float32)
    edge_index = jax.random.randint(k_edge, (2, E), 0, N, dtype=jnp.int32)
    params = make_params(k_param, in_size, hidden_size, out_size)

    # Small tiles so the 2-D (row, K) grid and the accumulator path are exercised.
    out = graphsage_forward(x, edge_index, params, tm=128, tk=128)
    out = jax.block_until_ready(out)

    assert out.shape == (N, 2)
    # Exact softmax division -> rows sum to 1 up to f32 rounding.
    assert bool(jnp.allclose(jnp.sum(out, axis=-1), 1.0, atol=1e-5))
    ref = graphsage_reference(x, edge_index, params)
    # bf16 inputs to the N^2 matmuls (f32 accumulation) -> modest tolerance.
    assert bool(jnp.allclose(out, ref, atol=5e-3, rtol=5e-3))
    print("KERNEL_OK")
</pallas_src>

<mosaic_0001>
module attributes {stable_mosaic.version = 11 : i64} {
  func.func @_layer1_kernel(%arg0: i32, %arg1: i32, %arg2: memref<128x128xbf16, #tpu.memory_space<vmem>>, %arg3: memref<128x8xbf16, #tpu.memory_space<vmem>>, %arg4: memref<128x8xf32, #tpu.memory_space<vmem>>, %arg5: memref<128x1xf32, #tpu.memory_space<vmem>>, %arg6: memref<8x32xf32, #tpu.memory_space<vmem>>, %arg7: memref<1x32xf32, #tpu.memory_space<vmem>>, %arg8: memref<8x32xf32, #tpu.memory_space<vmem>>, %arg9: memref<32x16xf32, #tpu.memory_space<vmem>>, %arg10: memref<128x32xf32, #tpu.memory_space<vmem>>, %arg11: memref<128x16xbf16, #tpu.memory_space<vmem>>, %arg12: memref<128x8xf32, #tpu.memory_space<vmem>>) attributes {dimension_semantics = [#tpu.dimension_semantics<parallel>, #tpu.dimension_semantics<arbitrary>], iteration_bounds = array<i64: 2, 2>, scalar_prefetch = 0 : i64, scratch_operands = 1 : i64, tpu.core_type = #tpu.core_type<tc>, window_params = [{transform_indices = @transform_0, window_bounds = array<i64: 128, 128>}, {transform_indices = @transform_1, window_bounds = array<i64: 128, 8>}, {transform_indices = @transform_2, window_bounds = array<i64: 128, 8>}, {transform_indices = @transform_3, window_bounds = array<i64: 128, 1>}, {pipeline_mode = #tpu.pipeline_mode<synchronous>, transform_indices = @transform_4, window_bounds = array<i64: 8, 32>}, {pipeline_mode = #tpu.pipeline_mode<synchronous>, transform_indices = @transform_5, window_bounds = array<i64: 1, 32>}, {pipeline_mode = #tpu.pipeline_mode<synchronous>, transform_indices = @transform_6, window_bounds = array<i64: 8, 32>}, {pipeline_mode = #tpu.pipeline_mode<synchronous>, transform_indices = @transform_7, window_bounds = array<i64: 32, 16>}, {transform_indices = @transform_8, window_bounds = array<i64: 128, 32>}, {transform_indices = @transform_9, window_bounds = array<i64: 128, 16>}]} {
    %c0_i32 = arith.constant 0 : i32
    %0 = arith.cmpi eq, %arg1, %c0_i32 : i32
    %1 = arith.extui %0 : i1 to i32
    %c0_i32_0 = arith.constant 0 : i32
    %2 = arith.cmpi ne, %1, %c0_i32_0 : i32
    scf.if %2 {
      %cst_9 = arith.constant 0.000000e+00 : f32
      %12 = vector.broadcast %cst_9 : f32 to vector<128x8xf32>
      %c0_10 = arith.constant 0 : index
      %c0_11 = arith.constant 0 : index
      %13 = vector.load %arg12[%c0_10, %c0_11] : memref<128x8xf32, #tpu.memory_space<vmem>>, vector<128x8xf32>
      tpu.vector_store %arg12[%c0_10, %c0_11], %12 {strides = array<i32>} : memref<128x8xf32, #tpu.memory_space<vmem>>, vector<128x8xf32>,
    } else {
    }
    %c0 = arith.constant 0 : index
    %c0_1 = arith.constant 0 : index
    %3 = vector.load %arg12[%c0, %c0_1] : memref<128x8xf32, #tpu.memory_space<vmem>>, vector<128x8xf32>
    %c0_2 = arith.constant 0 : index
    %c0_3 = arith.constant 0 : index
    %4 = vector.load %arg2[%c0_2, %c0_3] : memref<128x128xbf16, #tpu.memory_space<vmem>>, vector<128x128xbf16>
    %c0_4 = arith.constant 0 : index
    %c0_5 = arith.constant 0 : index
    %5 = vector.load %arg3[%c0_4, %c0_5] : memref<128x8xbf16, #tpu.memory_space<vmem>>, vector<128x8xbf16>
    %cst = arith.constant dense<0.000000e+00> : vector<128x8xf32>
    %6 = tpu.matmul %4, %5, %cst {dimension_numbers = #tpu.dot_dimension_numbers<[1], [0], [0], [1], [0, 0, 1, 1], [], []>} : vector<128x128xbf16>, vector<128x8xbf16>, vector<128x8xf32> -> vector<128x8xf32>
    %7 = arith.addf %3, %6 : vector<128x8xf32>
    %c0_6 = arith.constant 0 : index
    %c0_7 = arith.constant 0 : index
    %8 = vector.load %arg12[%c0_6, %c0_7] : memref<128x8xf32, #tpu.memory_space<vmem>>, vector<128x8xf32>
    tpu.vector_store %arg12[%c0_6, %c0_7], %7 {strides = array<i32>} : memref<128x8xf32, #tpu.memory_space<vmem>>, vector<128x8xf32>,
    %c1_i32 = arith.constant 1 : i32
    %9 = arith.cmpi eq, %arg1, %c1_i32 : i32
    %10 = arith.extui %9 : i1 to i32
    %c0_i32_8 = arith.constant 0 : i32
    %11 = arith.cmpi ne, %10, %c0_i32_8 : i32
    scf.if %11 {
      %c0_9 = arith.constant 0 : index
      %c0_10 = arith.constant 0 : index
      %12 = vector.load %arg12[%c0_9, %c0_10] : memref<128x8xf32, #tpu.memory_space<vmem>>, vector<128x8xf32>
      %c0_11 = arith.constant 0 : index
      %c0_12 = arith.constant 0 : index
      %13 = vector.load %arg5[%c0_11, %c0_12] : memref<128x1xf32, #tpu.memory_space<vmem>>, vector<128x1xf32>
      %14 = vector.broadcast %13 : vector<128x1xf32> to vector<128x8xf32>
      %15 = arith.mulf %12, %14 : vector<128x8xf32>
      %c0_13 = arith.constant 0 : index
      %c0_14 = arith.constant 0 : index
      %16 = vector.load %arg6[%c0_13, %c0_14] : memref<8x32xf32, #tpu.memory_space<vmem>>, vector<8x32xf32>
      %cst_15 = arith.constant dense<0.000000e+00> : vector<128x32xf32>
      %17 = tpu.matmul %15, %16, %cst_15 {dimension_numbers = #tpu.dot_dimension_numbers<[1], [0], [0], [1], [0, 0, 1, 1], [], []>} : vector<128x8xf32>, vector<8x32xf32>, vector<128x32xf32> -> vector<128x32xf32>
      %c0_16 = arith.constant 0 : index
      %c0_17 = arith.constant 0 : index
      %18 = vector.load %arg7[%c0_16, %c0_17] : memref<1x32xf32, #tpu.memory_space<vmem>>, vector<1x32xf32>
      %19 = vector.broadcast %18 : vector<1x32xf32> to vector<128x32xf32>
      %20 = arith.addf %17, %19 : vector<128x32xf32>
      %c0_18 = arith.constant 0 : index
      %c0_19 = arith.constant 0 : index
      %21 = vector.load %arg4[%c0_18, %c0_19] : memref<128x8xf32, #tpu.memory_space<vmem>>, vector<128x8xf32>
      %c0_20 = arith.constant 0 : index
      %c0_21 = arith.constant 0 : index
      %22 = vector.load %arg8[%c0_20, %c0_21] : memref<8x32xf32, #tpu.memory_space<vmem>>, vector<8x32xf32>
      %cst_22 = arith.constant dense<0.000000e+00> : vector<128x32xf32>
      %23 = tpu.matmul %21, %22, %cst_22 {dimension_numbers = #tpu.dot_dimension_numbers<[1], [0], [0], [1], [0, 0, 1, 1], [], []>} : vector<128x8xf32>, vector<8x32xf32>, vector<128x32xf32> -> vector<128x32xf32>
      %24 = arith.addf %20, %23 : vector<128x32xf32>
      %25 = arith.mulf %24, %24 : vector<128x32xf32>
      %cst_23 = arith.constant dense<0.000000e+00> : vector<128xf32>
      %26 = vector.multi_reduction <add>, %25, %cst_23 [1] : vector<128x32xf32> to vector<128xf32>
      %27 = vector.shape_cast %26 : vector<128xf32> to vector<128x1xf32>
      %cst_24 = arith.constant 1.000000e-24 : f32
      %28 = vector.broadcast %cst_24 : f32 to vector<128x1xf32>
      %29 = arith.maximumf %27, %28 : vector<128x1xf32>
      %30 = math.rsqrt %29 : vector<128x1xf32>
      %31 = vector.broadcast %30 : vector<128x1xf32> to vector<128x32xf32>
      %32 = arith.mulf %24, %31 : vector<128x32xf32>
      %cst_25 = arith.constant 0.000000e+00 : f32
      %33 = vector.broadcast %cst_25 : f32 to vector<128x32xf32>
      %34 = arith.maximumf %32, %33 : vector<128x32xf32>
      %c0_26 = arith.constant 0 : index
      %c0_27 = arith.constant 0 : index
      %35 = vector.load %arg10[%c0_26, %c0_27] : memref<128x32xf32, #tpu.memory_space<vmem>>, vector<128x32xf32>
      tpu.vector_store %arg10[%c0_26, %c0_27], %34 {strides = array<i32>} : memref<128x32xf32, #tpu.memory_space<vmem>>, vector<128x32xf32>,
      %c0_28 = arith.constant 0 : index
      %c0_29 = arith.constant 0 : index
      %36 = vector.load %arg9[%c0_28, %c0_29] : memref<32x16xf32, #tpu.memory_space<vmem>>, vector<32x16xf32>
      %cst_30 = arith.constant dense<0.000000e+00> : vector<128x16xf32>
      %37 = tpu.matmul %34, %36, %cst_30 {dimension_numbers = #tpu.dot_dimension_numbers<[1], [0], [0], [1], [0, 0, 1, 1], [], []>} : vector<128x32xf32>, vector<32x16xf32>, vector<128x16xf32> -> vector<128x16xf32>
      %38 = arith.truncf %37 : vector<128x16xf32> to vector<128x16xbf16>
      %c0_31 = arith.constant 0 : index
      %c0_32 = arith.constant 0 : index
      %39 = vector.load %arg11[%c0_31, %c0_32] : memref<128x16xbf16, #tpu.memory_space<vmem>>, vector<128x16xbf16>
      tpu.vector_store %arg11[%c0_31, %c0_32], %38 {strides = array<i32>} : memref<128x16xbf16, #tpu.memory_space<vmem>>, vector<128x16xbf16>,
    } else {
    }
    return
  }
  func.func @transform_0(%arg0: i32, %arg1: i32) -> (i32, i32) {
    %c0_i32 = arith.constant 0 : i32
    return %arg0, %arg1 : i32, i32
  }
  func.func @transform_1(%arg0: i32, %arg1: i32) -> (i32, i32) {
    %c0_i32 = arith.constant 0 : i32
    %c0_i32_0 = arith.constant 0 : i32
    return %arg1, %c0_i32 : i32, i32
  }
  func.func @transform_2(%arg0: i32, %arg1: i32) -> (i32, i32) {
    %c0_i32 = arith.constant 0 : i32
    %c0_i32_0 = arith.constant 0 : i32
    return %arg0, %c0_i32 : i32, i32
  }
  func.func @transform_3(%arg0: i32, %arg1: i32) -> (i32, i32) {
    %c0_i32 = arith.constant 0 : i32
    %c0_i32_0 = arith.constant 0 : i32
    return %arg0, %c0_i32 : i32, i32
  }
  func.func @transform_4(%arg0: i32, %arg1: i32) -> (i32, i32) {
    %c0_i32 = arith.constant 0 : i32
    %c0_i32_0 = arith.constant 0 : i32
    %c0_i32_1 = arith.constant 0 : i32
    return %c0_i32, %c0_i32_0 : i32, i32
  }
  func.func @transform_5(%arg0: i32, %arg1: i32) -> (i32, i32) {
    %c0_i32 = arith.constant 0 : i32
    %c0_i32_0 = arith.constant 0 : i32
    %c0_i32_1 = arith.constant 0 : i32
    return %c0_i32, %c0_i32_0 : i32, i32
  }
  func.func @transform_6(%arg0: i32, %arg1: i32) -> (i32, i32) {
    %c0_i32 = arith.constant 0 : i32
    %c0_i32_0 = arith.constant 0 : i32
    %c0_i32_1 = arith.constant 0 : i32
    return %c0_i32, %c0_i32_0 : i32, i32
  }
  func.func @transform_7(%arg0: i32, %arg1: i32) -> (i32, i32) {
    %c0_i32 = arith.constant 0 : i32
    %c0_i32_0 = arith.constant 0 : i32
    %c0_i32_1 = arith.constant 0 : i32
    return %c0_i32, %c0_i32_0 : i32, i32
  }
  func.func @transform_8(%arg0: i32, %arg1: i32) -> (i32, i32) {
    %c0_i32 = arith.constant 0 : i32
    %c0_i32_0 = arith.constant 0 : i32
    return %arg0, %c0_i32 : i32, i32
  }
  func.func @transform_9(%arg0: i32, %arg1: i32) -> (i32, i32) {
    %c0_i32 = arith.constant 0 : i32
    %c0_i32_0 = arith.constant 0 : i32
    return %arg0, %c0_i32 : i32, i32
  }
}

</mosaic_0001>

<llo_original>
// kernel: tpu_custom_call.1
$region0: #{tpu_custom_call.1}
  #allocation0 [shape = 'u32[]', space=smem, size = 0x4, offset = 0x4, fixed_abs, tag = 'smem constant byte address 0x4 - core index']
  #allocation1 [shape = 'u32[144,128]{1,0:T(1,128)}', space=vmem, size = 0x12000, scoped, tag = 'internal scratch']
  #allocation2 [shape = 'f32[128,8]{1,0:T(8,128)}', space=vmem, size = 0x10000, scoped, tag = 'scratch operand']
  %s0 = inlined_call_operand.vmem [shape: bf16[256,256], index: 0, kind: input, shape index: {}]
  %s1 = inlined_call_operand.vmem [shape: bf16[256,8], index: 1, kind: input, shape index: {}]
  %s2 = inlined_call_operand.vmem [shape: f32[256,8], index: 2, kind: input, shape index: {}]
  %s3 = inlined_call_operand.vmem [shape: f32[256,1], index: 3, kind: input, shape index: {}]
  %s4 = inlined_call_operand.vmem [shape: f32[8,32], index: 4, kind: input, shape index: {}]
  %s5 = inlined_call_operand.vmem [shape: f32[1,32], index: 5, kind: input, shape index: {}]
  %s6 = inlined_call_operand.vmem [shape: f32[8,32], index: 6, kind: input, shape index: {}]
  %s7 = inlined_call_operand.vmem [shape: f32[32,16], index: 7, kind: input, shape index: {}]
  %s8 = inlined_call_operand.vmem [shape: f32[256,32], index: 8, kind: output, shape index: {0}]
  %s9 = inlined_call_operand.vmem [shape: bf16[256,16], index: 9, kind: output, shape index: {1}]
  %10 = xla_tuple %s8, %s9
  %s11 = sld [smem:[#allocation0]]
  $region122: #{tpu_custom_call.1} parent=0
    _
  %s13 = ssub.s32 1, %s11
  %s14 = scalar_select 0, %s13, %s11
  $region1: #{tpu_custom_call.1} parent=0
    #allocation3 [shape = 'u8[65536]{0}', space=vmem, size = 0x10000, scoped, tag = 'input window, operand 0']
    loop: start=0, step=1, limit=6
    $region2: #{tpu_custom_call.1} parent=1 // loop_pre_header
      _
    $region3: #{tpu_custom_call.1} parent=1 // loop_header
      %s16 = sphi 0, %s20
      %p17 = scmp.ge.s32.totalorder %s16, 6
      %s23 = sphi 0, %s35
      %s24 = sphi 0, %s31
      %s25 = sphi 0, %s23
      %s26 = sphi 0, %s24
      %s27 = sphi 0, %s25
      %s28 = sphi 0, %s26
      %s40 = sphi 0, %s42
      %s43 = sphi 0, %s40
      %s44 = sphi 0, %s43
      %s60 = sphi 0, %s44
      %s66 = sphi 0, %s68
      %s69 = sphi 0, %s66
      %s70 = sphi 0, %s69
      %s86 = sphi 0, %s70
      %s92 = sphi 0, %s94
      %s95 = sphi 0, %s92
      %s96 = sphi 0, %s95
      %s112 = sphi 0, %s96
      %s118 = sphi 0, %s120
      %s121 = sphi 0, %s118
      %s122 = sphi 0, %s121
      %s138 = sphi 0, %s122
      %s142 = sphi 0, %s142
      %s144 = sphi 0, %s142
      %s145 = sphi 0, %s144
      %s159 = sphi 0, %s145
      %s163 = sphi 0, %s163
      %s165 = sphi 0, %s163
      %s166 = sphi 0, %s165
      %s180 = sphi 0, %s166
      %s184 = sphi 0, %s184
      %s186 = sphi 0, %s184
      %s187 = sphi 0, %s186
      %s201 = sphi 0, %s187
      %s205 = sphi 0, %s205
      %s207 = sphi 0, %s205
      %s208 = sphi 0, %s207
      %s222 = sphi 0, %s208
      %s228 = sphi 0, %s230
      %s231 = sphi 0, %s228
      %s232 = sphi 0, %s231
      %s248 = sphi 0, %s232
      %s254 = sphi 0, %s256
      %s257 = sphi 0, %s254
      %s258 = sphi 0, %s257
      %s274 = sphi 0, %s258
    $region4: #{tpu_custom_call.1} parent=1 // loop_header_branch
      %19 = sbr.rel (%p17) target = $region8
    $region5: #{tpu_custom_call.1} parent=1 // loop_body
      %s21 = ssub.s32 %s16, 1
      %s22 = ssub.s32 %s16, 2
      %s29 = sadd.s32 1, %s24
      %p30 = scmp.ge.s32.totalorder %s29, 2
      %s31 = scalar_select %p30, 0, %s29
      %s32 = sadd.s32 1, %s23
      %s33 = scalar_select %p30, %s32, %s23
      %p34 = scmp.ge.s32.totalorder %s33, 2
      %s35 = scalar_select %p34, 0, %s33
      %s36 = ssub.s32 %s23, %s35
      %s37 = ssub.s32 %s24, %s31
      %s38 = sor.u32 %s36, %s37
      %p39 = scmp.eq.s32.totalorder %s38, 0
      %s41 = sadd.s32 %s40, 1
      %s42 = scalar_select %p39, %s40, %s41
      %p45 = pneg %p39
      %p46 = scmp.eq.s32.totalorder %s16, 3
      %p47 = por %p45, %p46
      %p48 = scmp.ne.s32.totalorder %s40, %s43
      %p49 = scmp.eq.s32.totalorder %s16, 0
      %p50 = por %p48, %p49
      %p51 = scmp.ne.s32.totalorder %s40, %s43
      %p52 = scmp.eq.s32.totalorder %s21, 3
      %p53 = por %p51, %p52
      %p54 = scmp.ne.s32.totalorder %s43, %s44
      %p55 = scmp.eq.s32.totalorder %s21, 0
      %p56 = por %p54, %p55
      %p57 = scmp.ne.s32.totalorder %s43, %s44
      %p58 = scmp.eq.s32.totalorder %s22, 3
      %p59 = por %p57, %p58
      %p61 = scmp.ne.s32.totalorder %s44, %s60
      %p62 = scmp.eq.s32.totalorder %s22, 0
      %p63 = por %p61, %p62
      %s64 = ssub.s32 %s24, %s31
      %p65 = scmp.eq.s32.totalorder %s64, 0
      %s67 = sadd.s32 %s66, 1
      %s68 = scalar_select %p65, %s66, %s67
      %p71 = pneg %p65
      %p72 = scmp.eq.s32.totalorder %s16, 3
      %p73 = por %p71, %p72
      %p74 = scmp.ne.s32.totalorder %s66, %s69
      %p75 = scmp.eq.s32.totalorder %s16, 0
      %p76 = por %p74, %p75
      %p77 = scmp.ne.s32.totalorder %s66, %s69
      %p78 = scmp.eq.s32.totalorder %s21, 3
      %p79 = por %p77, %p78
      %p80 = scmp.ne.s32.totalorder %s69, %s70
      %p81 = scmp.eq.s32.totalorder %s21, 0
      %p82 = por %p80, %p81
      %p83 = scmp.ne.s32.totalorder %s69, %s70
      %p84 = scmp.eq.s32.totalorder %s22, 3
      %p85 = por %p83, %p84
      %p87 = scmp.ne.s32.totalorder %s70, %s86
      %p88 = scmp.eq.s32.totalorder %s22, 0
      %p89 = por %p87, %p88
      %s90 = ssub.s32 %s23, %s35
      %p91 = scmp.eq.s32.totalorder %s90, 0
      %s93 = sadd.s32 %s92, 1
      %s94 = scalar_select %p91, %s92, %s93
      %p97 = pneg %p91
      %p98 = scmp.eq.s32.totalorder %s16, 3
      %p99 = por %p97, %p98
      %p100 = scmp.ne.s32.totalorder %s92, %s95
      %p101 = scmp.eq.s32.totalorder %s16, 0
      %p102 = por %p100, %p101
      %p103 = scmp.ne.s32.totalorder %s92, %s95
      %p104 = scmp.eq.s32.totalorder %s21, 3
      %p105 = por %p103, %p104
      %p106 = scmp.ne.s32.totalorder %s95, %s96
      %p107 = scmp.eq.s32.totalorder %s21, 0
      %p108 = por %p106, %p107
      %p109 = scmp.ne.s32.totalorder %s95, %s96
      %p110 = scmp.eq.s32.totalorder %s22, 3
      %p111 = por %p109, %p110
      %p113 = scmp.ne.s32.totalorder %s96, %s112
      %p114 = scmp.eq.s32.totalorder %s22, 0
      %p115 = por %p113, %p114
      %s116 = ssub.s32 %s23, %s35
      %p117 = scmp.eq.s32.totalorder %s116, 0
      %s119 = sadd.s32 %s118, 1
      %s120 = scalar_select %p117, %s118, %s119
      %p123 = pneg %p117
      %p124 = scmp.eq.s32.totalorder %s16, 3
      %p125 = por %p123, %p124
      %p126 = scmp.ne.s32.totalorder %s118, %s121
      %p127 = scmp.eq.s32.totalorder %s16, 0
      %p128 = por %p126, %p127
      %p129 = scmp.ne.s32.totalorder %s118, %s121
      %p130 = scmp.eq.s32.totalorder %s21, 3
      %p131 = por %p129, %p130
      %p132 = scmp.ne.s32.totalorder %s121, %s122
      %p133 = scmp.eq.s32.totalorder %s21, 0
      %p134 = por %p132, %p133
      %p135 = scmp.ne.s32.totalorder %s121, %s122
      %p136 = scmp.eq.s32.totalorder %s22, 3
      %p137 = por %p135, %p136
      %p139 = scmp.ne.s32.totalorder %s122, %s138
      %p140 = scmp.eq.s32.totalorder %s22, 0
      %p141 = por %p139, %p140
      %s143 = sadd.s32 %s142, 1
      %p146 = scmp.eq.s32.totalorder %s16, 3
      %p147 = scmp.ne.s32.totalorder %s142, %s144
      %p148 = scmp.eq.s32.totalorder %s16, 0
      %p149 = por %p147, %p148
      %p150 = scmp.ne.s32.totalorder %s142, %s144
      %p151 = scmp.eq.s32.totalorder %s21, 3
      %p152 = por %p150, %p151
      %p153 = scmp.ne.s32.totalorder %s144, %s145
      %p154 = scmp.eq.s32.totalorder %s21, 0
      %p155 = por %p153, %p154
      %p156 = scmp.ne.s32.totalorder %s144, %s145
      %p157 = scmp.eq.s32.totalorder %s22, 3
      %p158 = por %p156, %p157
      %p160 = scmp.ne.s32.totalorder %s145, %s159
      %p161 = scmp.eq.s32.totalorder %s22, 0
      %p162 = por %p160, %p161
      %s164 = sadd.s32 %s163, 1
      %p167 = scmp.eq.s32.totalorder %s16, 3
      %p168 = scmp.ne.s32.totalorder %s163, %s165
      %p169 = scmp.eq.s32.totalorder %s16, 0
      %p170 = por %p168, %p169
      %p171 = scmp.ne.s32.totalorder %s163, %s165
      %p172 = scmp.eq.s32.totalorder %s21, 3
      %p173 = por %p171, %p172
      %p174 = scmp.ne.s32.totalorder %s165, %s166
      %p175 = scmp.eq.s32.totalorder %s21, 0
      %p176 = por %p174, %p175
      %p177 = scmp.ne.s32.totalorder %s165, %s166
      %p178 = scmp.eq.s32.totalorder %s22, 3
      %p179 = por %p177, %p178
      %p181 = scmp.ne.s32.totalorder %s166, %s180
      %p182 = scmp.eq.s32.totalorder %s22, 0
      %p183 = por %p181, %p182
      %s185 = sadd.s32 %s184, 1
      %p188 = scmp.eq.s32.totalorder %s16, 3
      %p189 = scmp.ne.s32.totalorder %s184, %s186
      %p190 = scmp.eq.s32.totalorder %s16, 0
      %p191 = por %p189, %p190
      %p192 = scmp.ne.s32.totalorder %s184, %s186
      %p193 = scmp.eq.s32.totalorder %s21, 3
      %p194 = por %p192, %p193
      %p195 = scmp.ne.s32.totalorder %s186, %s187
      %p196 = scmp.eq.s32.totalorder %s21, 0
      %p197 = por %p195, %p196
      %p198 = scmp.ne.s32.totalorder %s186, %s187
      %p199 = scmp.eq.s32.totalorder %s22, 3
      %p200 = por %p198, %p199
      %p202 = scmp.ne.s32.totalorder %s187, %s201
      %p203 = scmp.eq.s32.totalorder %s22, 0
      %p204 = por %p202, %p203
      %s206 = sadd.s32 %s205, 1
      %p209 = scmp.eq.s32.totalorder %s16, 3
      %p210 = scmp.ne.s32.totalorder %s205, %s207
      %p211 = scmp.eq.s32.totalorder %s16, 0
      %p212 = por %p210, %p211
      %p213 = scmp.ne.s32.totalorder %s205, %s207
      %p214 = scmp.eq.s32.totalorder %s21, 3
      %p215 = por %p213, %p214
      %p216 = scmp.ne.s32.totalorder %s207, %s208
      %p217 = scmp.eq.s32.totalorder %s21, 0
      %p218 = por %p216, %p217
      %p219 = scmp.ne.s32.totalorder %s207, %s208
      %p220 = scmp.eq.s32.totalorder %s22, 3
      %p221 = por %p219, %p220
      %p223 = scmp.ne.s32.totalorder %s208, %s222
      %p224 = scmp.eq.s32.totalorder %s22, 0
      %p225 = por %p223, %p224
      %s226 = ssub.s32 %s23, %s35
      %p227 = scmp.eq.s32.totalorder %s226, 0
      %s229 = sadd.s32 %s228, 1
      %s230 = scalar_select %p227, %s228, %s229
      %p233 = pneg %p227
      %p234 = scmp.eq.s32.totalorder %s16, 3
      %p235 = por %p233, %p234
      %p236 = scmp.ne.s32.totalorder %s228, %s231
      %p237 = scmp.eq.s32.totalorder %s16, 0
      %p238 = por %p236, %p237
      %p239 = scmp.ne.s32.totalorder %s228, %s231
      %p240 = scmp.eq.s32.totalorder %s21, 3
      %p241 = por %p239, %p240
      %p242 = scmp.ne.s32.totalorder %s231, %s232
      %p243 = scmp.eq.s32.totalorder %s21, 0
      %p244 = por %p242, %p243
      %p245 = scmp.ne.s32.totalorder %s231, %s232
      %p246 = scmp.eq.s32.totalorder %s22, 3
      %p247 = por %p245, %p246
      %p249 = scmp.ne.s32.totalorder %s232, %s248
      %p250 = scmp.eq.s32.totalorder %s22, 0
      %p251 = por %p249, %p250
      %s252 = ssub.s32 %s23, %s35
      %p253 = scmp.eq.s32.totalorder %s252, 0
      %s255 = sadd.s32 %s254, 1
      %s256 = scalar_select %p253, %s254, %s255
      %p259 = pneg %p253
      %p260 = scmp.eq.s32.totalorder %s16, 3
      %p261 = por %p259, %p260
      %p262 = scmp.ne.s32.totalorder %s254, %s257
      %p263 = scmp.eq.s32.totalorder %s16, 0
      %p264 = por %p262, %p263
      %p265 = scmp.ne.s32.totalorder %s254, %s257
      %p266 = scmp.eq.s32.totalorder %s21, 3
      %p267 = por %p265, %p266
      %p268 = scmp.ne.s32.totalorder %s257, %s258
      %p269 = scmp.eq.s32.totalorder %s21, 0
      %p270 = por %p268, %p269
      %p271 = scmp.ne.s32.totalorder %s257, %s258
      %p272 = scmp.eq.s32.totalorder %s22, 3
      %p273 = por %p271, %p272
      %p275 = scmp.ne.s32.totalorder %s258, %s274
      %p276 = scmp.eq.s32.totalorder %s22, 0
      %p277 = por %p275, %p276
      %p278 = scmp.le.s32.totalorder 1, %s16
      %p279 = scmp.lt.s32.totalorder %s16, 5
      %p280 = pnand %p278, %p279
      %p281 = pneg %p280
      // Predicated region
      $region9: #{tpu_custom_call.1} parent=5 // pred_check
        _
      $region10: #{tpu_custom_call.1} parent=5 // pred_check_branch
        %283 = sbr.rel (%p280) target = $region12
      $region11: #{tpu_custom_call.1} parent=5 // pred_region
        %s284 = ssub.s32 %s16, 1
        // Predicated region
        $region13: #{tpu_custom_call.1} parent=11 // pred_check
          %p285 = pneg %p155
        $region14: #{tpu_custom_call.1} parent=11 // pred_check_branch
          %287 = sbr.rel (%p285) target = $region16
        $region15: #{tpu_custom_call.1} parent=11 // pred_region
          _
        $region16: #{tpu_custom_call.1} parent=11 // pred_fallthru
          _
        // Predicated region
        $region17: #{tpu_custom_call.1} parent=11 // pred_check
          %p288 = pneg %p176
        $region18: #{tpu_custom_call.1} parent=11 // pred_check_branch
          %290 = sbr.rel (%p288) target = $region20
        $region19: #{tpu_custom_call.1} parent=11 // pred_region
          _
        $region20: #{tpu_custom_call.1} parent=11 // pred_fallthru
          _
        // Predicated region
        $region21: #{tpu_custom_call.1} parent=11 // pred_check
          %p291 = pneg %p197
        $region22: #{tpu_custom_call.1} parent=11 // pred_check_branch
          %293 = sbr.rel (%p291) target = $region24
        $region23: #{tpu_custom_call.1} parent=11 // pred_region
          _
        $region24: #{tpu_custom_call.1} parent=11 // pred_fallthru
          _
        // Predicated region
        $region25: #{tpu_custom_call.1} parent=11 // pred_check
          %p294 = pneg %p218
        $region26: #{tpu_custom_call.1} parent=11 // pred_check_branch
          %296 = sbr.rel (%p294) target = $region28
        $region27: #{tpu_custom_call.1} parent=11 // pred_region
          _
        $region28: #{tpu_custom_call.1} parent=11 // pred_fallthru
          _
      $region12: #{tpu_custom_call.1} parent=5 // pred_fallthru
        _
      %p297 = scmp.lt.s32.totalorder %s16, 4
      // Predicated region
      $region29: #{tpu_custom_call.1} parent=5 // pred_check
        %p298 = pneg %p297
      $region30: #{tpu_custom_call.1} parent=5 // pred_check_branch
        %300 = sbr.rel (%p298) target = $region32
      $region31: #{tpu_custom_call.1} parent=5 // pred_region
        // Predicated region
        $region33: #{tpu_custom_call.1} parent=31 // pred_check
          %p301 = pneg %p50
        $region34: #{tpu_custom_call.1} parent=31 // pred_check_branch
          %303 = sbr.rel (%p301) target = $region36
        $region35: #{tpu_custom_call.1} parent=31 // pred_region
          %s304 = sand.u32 %s40, 1
          %s305 = sand.u32 %s40, 1
          %s306 = smul.addr %s305, 64
          %s307 = scalar_lea.vmem [#allocation3], %s306
          %s308 = smul.u32 16, %s23
          %s309 = smul.addr %s308, 2
          %s310 = sadd.s32 %s24, %s309
          %s311 = smul.addr %s310, 4
          %s312 = scalar_lea.vmem %s0, %s311
          // Predicated region
          $region37: #{tpu_custom_call.1} parent=35 // pred_check
            _
          $region38: #{tpu_custom_call.1} parent=35 // pred_check_branch
            %314 = sbr.rel (0) target = $region40
          $region39: #{tpu_custom_call.1} parent=35 // pred_region
            // Predicated region
            $region41: #{tpu_custom_call.1} parent=39 // pred_check
              _
            $region42: #{tpu_custom_call.1} parent=39 // pred_check_branch
              %316 = sbr.rel target = $region44
            $region43: #{tpu_custom_call.1} parent=39 // pred_region
              // Predicated region
              $region56: #{tpu_custom_call.1} parent=43 // pred_check
                _
              $region57: #{tpu_custom_call.1} parent=43 // pred_check_branch
                %361 = sbr.rel (0) target = $region59
              $region58: #{tpu_custom_call.1} parent=43 // pred_region
                loop: start=0, step=1, limit=1
                $region60: #{tpu_custom_call.1} parent=58 // loop_pre_header
                  _
                $region61: #{tpu_custom_call.1} parent=58 // loop_header
                  %s363 = sphi 0, %s367
                  %p364 = scmp.ge.s32.totalorder %s363, 1
                  %s368 = sphi %s312, %s312
                  %s369 = sphi %s307, %s307
                $region62: #{tpu_custom_call.1} parent=58 // loop_header_branch
                  %366 = sbr.rel (%p364) target = $region66
                $region63: #{tpu_custom_call.1} parent=58 // loop_body
                  _
                $region64: #{tpu_custom_call.1} parent=58 // loop_footer
                  %s367 = sadd.s32 1, %s363
                $region65: #{tpu_custom_call.1} parent=58 // loop_footer_branch
                  %362 = sbr.rel target = $region61
                $region66: #{tpu_custom_call.1} parent=58 // loop_exit
                  _
                loop: start=0, step=1, limit=1
                $region67: #{tpu_custom_call.1} parent=58 // loop_pre_header
                  _
                $region68: #{tpu_custom_call.1} parent=58 // loop_header
                  %s372 = sphi 0, %s376
                  %p373 = scmp.ge.s32.totalorder %s372, 1
                  %s377 = sphi %s312, %s312
                  %s378 = sphi %s307, %s307
                $region69: #{tpu_custom_call.1} parent=58 // loop_header_branch
                  %375 = sbr.rel (%p373) target = $region73
                $region70: #{tpu_custom_call.1} parent=58 // loop_body
                  %v379 = vld [vmem:[%s377] sm:$0xf]
                  %380 = vst [vmem:[%s378] sm:$0xf] %v379
                  %v381 = vld [vmem:[%s377 + $0x8] sm:$0xf]
                  %382 = vst [vmem:[%s378 + $0x4] sm:$0xf] %v381
                  %v383 = vld [vmem:[%s377 + $0x10] sm:$0xf]
                  %384 = vst [vmem:[%s378 + $0x8] sm:$0xf] %v383
                  %v385 = vld [vmem:[%s377 + $0x18] sm:$0xf]
                  %386 = vst [vmem:[%s378 + $0xc] sm:$0xf] %v385
                  %v387 = vld [vmem:[%s377 + $0x20] sm:$0xf]
                  %388 = vst [vmem:[%s378 + $0x10] sm:$0xf] %v387
                  %v389 = vld [vmem:[%s377 + $0x28] sm:$0xf]
                  %390 = vst [vmem:[%s378 + $0x14] sm:$0xf] %v389
                  %v391 = vld [vmem:[%s377 + $0x30] sm:$0xf]
                  %392 = vst [vmem:[%s378 + $0x18] sm:$0xf] %v391
                  %v393 = vld [vmem:[%s377 + $0x38] sm:$0xf]
                  %394 = vst [vmem:[%s378 + $0x1c] sm:$0xf] %v393
                  %v395 = vld [vmem:[%s377 + $0x40] sm:$0xf]
                  %396 = vst [vmem:[%s378 + $0x20] sm:$0xf] %v395
                  %v397 = vld [vmem:[%s377 + $0x48] sm:$0xf]
                  %398 = vst [vmem:[%s378 + $0x24] sm:$0xf] %v397
                  %v399 = vld [vmem:[%s377 + $0x50] sm:$0xf]
                  %400 = vst [vmem:[%s378 + $0x28] sm:$0xf] %v399
                  %v401 = vld [vmem:[%s377 + $0x58] sm:$0xf]
                  %402 = vst [vmem:[%s378 + $0x2c] sm:$0xf] %v401
                  %v403 = vld [vmem:[%s377 + $0x60] sm:$0xf]
                  %404 = vst [vmem:[%s378 + $0x30] sm:$0xf] %v403
                  %v405 = vld [vmem:[%s377 + $0x68] sm:$0xf]
                  %406 = vst [vmem:[%s378 + $0x34] sm:$0xf] %v405
                  %v407 = vld [vmem:[%s377 + $0x70] sm:$0xf]
                  %408 = vst [vmem:[%s378 + $0x38] sm:$0xf] %v407
                  %v409 = vld [vmem:[%s377 + $0x78] sm:$0xf]
                  %410 = vst [vmem:[%s378 + $0x3c] sm:$0xf] %v409
                $region71: #{tpu_custom_call.1} parent=58 // loop_footer
                  %s376 = sadd.s32 1, %s372
                $region72: #{tpu_custom_call.1} parent=58 // loop_footer_branch
                  %371 = sbr.rel target = $region68
                $region73: #{tpu_custom_call.1} parent=58 // loop_exit
                  _
              $region59: #{tpu_custom_call.1} parent=43 // pred_fallthru
                _
            $region44: #{tpu_custom_call.1} parent=39 // pred_fallthru
              _
            // Predicated region
            $region45: #{tpu_custom_call.1} parent=39 // pred_check
              _
            $region46: #{tpu_custom_call.1} parent=39 // pred_check_branch
              %318 = sbr.rel (0) target = $region48
            $region47: #{tpu_custom_call.1} parent=39 // pred_region
              loop: start=0, step=1, limit=1
              $region49: #{tpu_custom_call.1} parent=47 // loop_pre_header
                _
              $region50: #{tpu_custom_call.1} parent=47 // loop_header
                %s321 = sphi 0, %s325
                %p322 = scmp.ge.s32.totalorder %s321, 1
                %s326 = sphi %s312, %s312
                %s327 = sphi %s307, %s307
              $region51: #{tpu_custom_call.1} parent=47 // loop_header_branch
                %324 = sbr.rel (%p322) target = $region55
              $region52: #{tpu_custom_call.1} parent=47 // loop_body
                %v328 = vld [vmem:[%s326] sm:$0xf]
                %329 = vst [vmem:[%s327] sm:$0xf] %v328
                %v330 = vld [vmem:[%s326 + $0x8] sm:$0xf]
                %331 = vst [vmem:[%s327 + $0x4] sm:$0xf] %v330
                %v332 = vld [vmem:[%s326 + $0x10] sm:$0xf]
                %333 = vst [vmem:[%s327 + $0x8] sm:$0xf] %v332
                %v334 = vld [vmem:[%s326 + $0x18] sm:$0xf]
                %335 = vst [vmem:[%s327 + $0xc] sm:$0xf] %v334
                %v336 = vld [vmem:[%s326 + $0x20] sm:$0xf]
                %337 = vst [vmem:[%s327 + $0x10] sm:$0xf] %v336
                %v338 = vld [vmem:[%s326 + $0x28] sm:$0xf]
                %339 = vst [vmem:[%s327 + $0x14] sm:$0xf] %v338
                %v340 = vld [vmem:[%s326 + $0x30] sm:$0xf]
                %341 = vst [vmem:[%s327 + $0x18] sm:$0xf] %v340
                %v342 = vld [vmem:[%s326 + $0x38] sm:$0xf]
                %343 = vst [vmem:[%s327 + $0x1c] sm:$0xf] %v342
                %v344 = vld [vmem:[%s326 + $0x40] sm:$0xf]
                %345 = vst [vmem:[%s327 + $0x20] sm:$0xf] %v344
                %v346 = vld [vmem:[%s326 + $0x48] sm:$0xf]
                %347 = vst [vmem:[%s327 + $0x24] sm:$0xf] %v346
                %v348 = vld [vmem:[%s326 + $0x50] sm:$0xf]
                %349 = vst [vmem:[%s327 + $0x28] sm:$0xf] %v348
                %v350 = vld [vmem:[%s326 + $0x58] sm:$0xf]
                %351 = vst [vmem:[%s327 + $0x2c] sm:$0xf] %v350
                %v352 = vld [vmem:[%s326 + $0x60] sm:$0xf]
                %353 = vst [vmem:[%s327 + $0x30] sm:$0xf] %v352
                %v354 = vld [vmem:[%s326 + $0x68] sm:$0xf]
                %355 = vst [vmem:[%s327 + $0x34] sm:$0xf] %v354
                %v356 = vld [vmem:[%s326 + $0x70] sm:$0xf]
                %357 = vst [vmem:[%s327 + $0x38] sm:$0xf] %v356
                %v358 = vld [vmem:[%s326 + $0x78] sm:$0xf]
                %359 = vst [vmem:[%s327 + $0x3c] sm:$0xf] %v358
              $region53: #{tpu_custom_call.1} parent=47 // loop_footer
                %s325 = sadd.s32 1, %s321
              $region54: #{tpu_custom_call.1} parent=47 // loop_footer_branch
                %320 = sbr.rel target = $region50
              $region55: #{tpu_custom_call.1} parent=47 // loop_exit
                _
            $region48: #{tpu_custom_call.1} parent=39 // pred_fallthru
              _
          $region40: #{tpu_custom_call.1} parent=35 // pred_fallthru
            _
          %411 = vnop
        $region36: #{tpu_custom_call.1} parent=31 // pred_fallthru
          _
        // Predicated region
        $region74: #{tpu_custom_call.1} parent=31 // pred_check
          %p412 = pneg %p76
        $region75: #{tpu_custom_call.1} parent=31 // pred_check_branch
          %414 = sbr.rel (%p412) target = $region77
        $region76: #{tpu_custom_call.1} parent=31 // pred_region
          %s415 = smul.u32 16, %s24
          %p416 = scmp.lt.s32.totalorder %s415, 31
          %s417 = scalar_select %p416, %s415, 31
          %s418 = smul.addr %s417, 4
          %s419 = scalar_lea.vmem %s1, %s418
          %s420 = smul.u32 16, %s24
        $region77: #{tpu_custom_call.1} parent=31 // pred_fallthru
          _
        // Predicated region
        $region78: #{tpu_custom_call.1} parent=31 // pred_check
          %p421 = pneg %p102
        $region79: #{tpu_custom_call.1} parent=31 // pred_check_branch
          %423 = sbr.rel (%p421) target = $region81
        $region80: #{tpu_custom_call.1} parent=31 // pred_region
          %s424 = smul.u32 16, %s23
          %p425 = scmp.lt.s32.totalorder %s424, 31
          %s426 = scalar_select %p425, %s424, 31
          %s427 = smul.addr %s426, 8
          %s428 = scalar_lea.vmem %s2, %s427
          %s429 = smul.u32 16, %s23
        $region81: #{tpu_custom_call.1} parent=31 // pred_fallthru
          _
        // Predicated region
        $region82: #{tpu_custom_call.1} parent=31 // pred_check
          %p430 = pneg %p128
        $region83: #{tpu_custom_call.1} parent=31 // pred_check_branch
          %432 = sbr.rel (%p430) target = $region85
        $region84: #{tpu_custom_call.1} parent=31 // pred_region
          %s433 = smul.u32 16, %s23
          %p434 = scmp.lt.s32.totalorder %s433, 31
          %s435 = scalar_select %p434, %s433, 31
          %s436 = smul.addr %s435, 8
          %s437 = scalar_lea.vmem %s3, %s436
          %s438 = smul.u32 16, %s23
        $region85: #{tpu_custom_call.1} parent=31 // pred_fallthru
          _
      $region32: #{tpu_custom_call.1} parent=5 // pred_fallthru
        _
      %p439 = scmp.le.s32.totalorder 1, %s16
      %p440 = scmp.lt.s32.totalorder %s16, 5
      %p441 = pnand %p439, %p440
      %p442 = pneg %p441
      // Predicated region
      $region86: #{tpu_custom_call.1} parent=5 // pred_check
        _
      $region87: #{tpu_custom_call.1} parent=5 // pred_check_branch
        %444 = sbr.rel (%p441) target = $region89
      $region88: #{tpu_custom_call.1} parent=5 // pred_region
        %s445 = ssub.s32 %s16, 1
        %s446 = sand.u32 %s43, 1
        %s447 = sand.u32 %s43, 1
        %s448 = smul.addr %s447, 64
        %s449 = scalar_lea.vmem [#allocation3], %s448
        // Predicated region
        $region90: #{tpu_custom_call.1} parent=88 // pred_check
          %p450 = pneg %p56
        $region91: #{tpu_custom_call.1} parent=88 // pred_check_branch
          %452 = sbr.rel (%p450) target = $region93
        $region92: #{tpu_custom_call.1} parent=88 // pred_region
          _
        $region93: #{tpu_custom_call.1} parent=88 // pred_fallthru
          _
        %s453 = sand.u32 %s43, 1
        %s454 = sand.u32 %s43, 1
        %s455 = smul.addr %s454, 64
        %s456 = scalar_lea.vmem [#allocation3], %s455
        %p457 = pneg %p56
        %p458 = pneg %p53
        %s459 = smul.u32 16, %s26
        %p460 = scmp.lt.s32.totalorder %s459, 31
        %s461 = scalar_select %p460, %s459, 31
        %s462 = smul.addr %s461, 4
        %s463 = scalar_lea.vmem %s1, %s462
        %p464 = pneg %p82
        %p465 = pneg %p79
        %s466 = smul.u32 16, %s25
        %p467 = scmp.lt.s32.totalorder %s466, 31
        %s468 = scalar_select %p467, %s466, 31
        %s469 = smul.addr %s468, 8
        %s470 = scalar_lea.vmem %s2, %s469
        %p471 = pneg %p108
        %p472 = pneg %p105
        %s473 = smul.u32 16, %s25
        %p474 = scmp.lt.s32.totalorder %s473, 31
        %s475 = scalar_select %p474, %s473, 31
        %s476 = smul.addr %s475, 8
        %s477 = scalar_lea.vmem %s3, %s476
        %p478 = pneg %p134
        %p479 = pneg %p131
        %p480 = pneg %p155
        %p481 = pneg %p152
        %p482 = pneg %p176
        %p483 = pneg %p173
        %p484 = pneg %p197
        %p485 = pneg %p194
        %p486 = pneg %p218
        %p487 = pneg %p215
        %p488 = pneg %p244
        %p489 = pneg %p241
        %s490 = smul.u32 16, %s25
        %p491 = scmp.lt.s32.totalorder %s490, 31
        %s492 = scalar_select %p491, %s490, 31
        %s493 = smul.addr %s492, 8
        %s494 = scalar_lea.vmem %s8, %s493
        %p495 = pneg %p270
        %p496 = pneg %p267
        %s497 = smul.u32 16, %s25
        %p498 = scmp.lt.s32.totalorder %s497, 31
        %s499 = scalar_select %p498, %s497, 31
        %s500 = smul.addr %s499, 4
        %s501 = scalar_lea.vmem %s9, %s500
        %s502 = smul.u32 16, %s25
        %s503 = smul.u32 16, %s26
        %p504 = scmp.lt.s32.totalorder %s503, 31
        %s505 = scalar_select %p504, %s503, 31
        %s506 = smul.addr %s505, 4
        %s507 = scalar_lea.vmem %s1, %s506
        %s508 = smul.u32 16, %s26
        %s509 = smul.u32 16, %s25
        %p510 = scmp.lt.s32.totalorder %s509, 31
        %s511 = scalar_select %p510, %s509, 31
        %s512 = smul.addr %s511, 8
        %s513 = scalar_lea.vmem %s2, %s512
        %s514 = smul.u32 16, %s25
        %s515 = smul.u32 16, %s25
        %p516 = scmp.lt.s32.totalorder %s515, 31
        %s517 = scalar_select %p516, %s515, 31
        %s518 = smul.addr %s517, 8
        %s519 = scalar_lea.vmem %s3, %s518
        %s520 = smul.u32 16, %s25
        %s521 = smul.u32 16, %s25
        %p522 = scmp.lt.s32.totalorder %s521, 31
        %s523 = scalar_select %p522, %s521, 31
        %s524 = smul.addr %s523, 8
        %s525 = scalar_lea.vmem %s8, %s524
        %s526 = smul.u32 16, %s25
        %s527 = smul.u32 16, %s25
        %p528 = scmp.lt.s32.totalorder %s527, 31
        %s529 = scalar_select %p528, %s527, 31
        %s530 = smul.addr %s529, 4
        %s531 = scalar_lea.vmem %s9, %s530
        %s532 = smul.u32 16, %s25
        %p534 = scmp.eq.s32.totalorder %s26, 0
        // Predicated region
        $region94: #{tpu_custom_call.1} parent=88 // pred_check
          %p535 = pneg %p534
        $region95: #{tpu_custom_call.1} parent=88 // pred_check_branch
          %537 = sbr.rel (%p535) target = $region97
        $region96: #{tpu_custom_call.1} parent=88 // pred_region
          %vm538 = vcmask 64512
          %539 = vst.msk [vmem:[#allocation2] sm:$0xff] %vm538, 0.0
          %540 = vst.msk [vmem:[#allocation2 + $0x8] sm:$0xff] %vm538, 0.0
          %541 = vst.msk [vmem:[#allocation2 + $0x10] sm:$0xff] %vm538, 0.0
          %542 = vst.msk [vmem:[#allocation2 + $0x18] sm:$0xff] %vm538, 0.0
          %543 = vst.msk [vmem:[#allocation2 + $0x20] sm:$0xff] %vm538, 0.0
          %544 = vst.msk [vmem:[#allocation2 + $0x28] sm:$0xff] %vm538, 0.0
          %545 = vst.msk [vmem:[#allocation2 + $0x30] sm:$0xff] %vm538, 0.0
          %546 = vst.msk [vmem:[#allocation2 + $0x38] sm:$0xff] %vm538, 0.0
          %547 = vst.msk [vmem:[#allocation2 + $0x40] sm:$0xff] %vm538, 0.0
          %548 = vst.msk [vmem:[#allocation2 + $0x48] sm:$0xff] %vm538, 0.0
          %549 = vst.msk [vmem:[#allocation2 + $0x50] sm:$0xff] %vm538, 0.0
          %550 = vst.msk [vmem:[#allocation2 + $0x58] sm:$0xff] %vm538, 0.0
          %551 = vst.msk [vmem:[#allocation2 + $0x60] sm:$0xff] %vm538, 0.0
          %552 = vst.msk [vmem:[#allocation2 + $0x68] sm:$0xff] %vm538, 0.0
          %553 = vst.msk [vmem:[#allocation2 + $0x70] sm:$0xff] %vm538, 0.0
          %554 = vst.msk [vmem:[#allocation2 + $0x78] sm:$0xff] %vm538, 0.0
        $region97: #{tpu_custom_call.1} parent=88 // pred_fallthru
          _
        %v555 = vld [vmem:[#allocation2] sm:$0xff]
        %v556 = vld [vmem:[#allocation2 + $0x8] sm:$0xff]
        %v557 = vld [vmem:[#allocation2 + $0x10] sm:$0xff]
        %v558 = vld [vmem:[#allocation2 + $0x18] sm:$0xff]
        %v559 = vld [vmem:[#allocation2 + $0x20] sm:$0xff]
        %v560 = vld [vmem:[#allocation2 + $0x28] sm:$0xff]
        %v561 = vld [vmem:[#allocation2 + $0x30] sm:$0xff]
        %v562 = vld [vmem:[#allocation2 + $0x38] sm:$0xff]
        %v563 = vld [vmem:[#allocation2 + $0x40] sm:$0xff]
        %v564 = vld [vmem:[#allocation2 + $0x48] sm:$0xff]
        %v565 = vld [vmem:[#allocation2 + $0x50] sm:$0xff]
        %v566 = vld [vmem:[#allocation2 + $0x58] sm:$0xff]
        %v567 = vld [vmem:[#allocation2 + $0x60] sm:$0xff]
        %v568 = vld [vmem:[#allocation2 + $0x68] sm:$0xff]
        %v569 = vld [vmem:[#allocation2 + $0x70] sm:$0xff]
        %v570 = vld [vmem:[#allocation2 + $0x78] sm:$0xff]
        %v571 = vld [vmem:[%s449] sm:$0xf]
        %v572 = vld [vmem:[%s449 + $0x4] sm:$0xf]
        %v573 = vld [vmem:[%s449 + $0x8] sm:$0xf]
        %v574 = vld [vmem:[%s449 + $0xc] sm:$0xf]
        %v575 = vld [vmem:[%s449 + $0x10] sm:$0xf]
        %v576 = vld [vmem:[%s449 + $0x14] sm:$0xf]
        %v577 = vld [vmem:[%s449 + $0x18] sm:$0xf]
        %v578 = vld [vmem:[%s449 + $0x1c] sm:$0xf]
        %v579 = vld [vmem:[%s449 + $0x20] sm:$0xf]
        %v580 = vld [vmem:[%s449 + $0x24] sm:$0xf]
        %v581 = vld [vmem:[%s449 + $0x28] sm:$0xf]
        %v582 = vld [vmem:[%s449 + $0x2c] sm:$0xf]
        %v583 = vld [vmem:[%s449 + $0x30] sm:$0xf]
        %v584 = vld [vmem:[%s449 + $0x34] sm:$0xf]
        %v585 = vld [vmem:[%s449 + $0x38] sm:$0xf]
        %v586 = vld [vmem:[%s449 + $0x3c] sm:$0xf]
        %v587 = vld [vmem:[%s507] sm:$0xf]
        %v588 = vld [vmem:[%s507 + $0x4] sm:$0xf]
        %v589 = vld [vmem:[%s507 + $0x8] sm:$0xf]
        %v590 = vld [vmem:[%s507 + $0xc] sm:$0xf]
        %v591 = vld [vmem:[%s507 + $0x10] sm:$0xf]
        %v592 = vld [vmem:[%s507 + $0x14] sm:$0xf]
        %v593 = vld [vmem:[%s507 + $0x18] sm:$0xf]
        %v594 = vld [vmem:[%s507 + $0x1c] sm:$0xf]
        %v595 = vld [vmem:[%s507 + $0x20] sm:$0xf]
        %v596 = vld [vmem:[%s507 + $0x24] sm:$0xf]
        %v597 = vld [vmem:[%s507 + $0x28] sm:$0xf]
        %v598 = vld [vmem:[%s507 + $0x2c] sm:$0xf]
        %v599 = vld [vmem:[%s507 + $0x30] sm:$0xf]
        %v600 = vld [vmem:[%s507 + $0x34] sm:$0xf]
        %v601 = vld [vmem:[%s507 + $0x38] sm:$0xf]
        %v602 = vld [vmem:[%s507 + $0x3c] sm:$0xf]
        %v619 = vunpack.c.l.b16 %v571
        %v620 = vunpack.c.l.b16 %v572
        %v621 = vunpack.c.l.b16 %v573
        %v622 = vunpack.c.l.b16 %v574
        %v623 = vunpack.c.l.b16 %v575
        %v624 = vunpack.c.l.b16 %v576
        %v625 = vunpack.c.l.b16 %v577
        %v626 = vunpack.c.l.b16 %v578
        %v627 = vunpack.c.l.b16 %v579
        %v628 = vunpack.c.l.b16 %v580
        %v629 = vunpack.c.l.b16 %v581
        %v630 = vunpack.c.l.b16 %v582
        %v631 = vunpack.c.l.b16 %v583
        %v632 = vunpack.c.l.b16 %v584
        %v633 = vunpack.c.l.b16 %v585
        %v634 = vunpack.c.l.b16 %v586
        %v635 = vpack.c.b16 %v620, %v619
        %v636 = vpack.c.b16 %v622, %v621
        %v637 = vpack.c.b16 %v624, %v623
        %v638 = vpack.c.b16 %v626, %v625
        %v639 = vpack.c.b16 %v628, %v627
        %v640 = vpack.c.b16 %v630, %v629
        %v641 = vpack.c.b16 %v632, %v631
        %v642 = vpack.c.b16 %v634, %v633
        %v667 = vunpack.c.l.b16 %v587
        %v668 = vunpack.c.l.b16 %v588
        %v669 = vunpack.c.l.b16 %v589
        %v670 = vunpack.c.l.b16 %v590
        %v671 = vunpack.c.l.b16 %v591
        %v672 = vunpack.c.l.b16 %v592
        %v673 = vunpack.c.l.b16 %v593
        %v674 = vunpack.c.l.b16 %v594
        %v675 = vunpack.c.l.b16 %v595
        %v676 = vunpack.c.l.b16 %v596
        %v677 = vunpack.c.l.b16 %v597
        %v678 = vunpack.c.l.b16 %v598
        %v679 = vunpack.c.l.b16 %v599
        %v680 = vunpack.c.l.b16 %v600
        %v681 = vunpack.c.l.b16 %v601
        %v682 = vunpack.c.l.b16 %v602
        %v683 = vpack.c.b16 %v668, %v667
        %v684 = vpack.c.b16 %v670, %v669
        %v685 = vpack.c.b16 %v672, %v671
        %v686 = vpack.c.b16 %v674, %v673
        %v687 = vpack.c.b16 %v676, %v675
        %v688 = vpack.c.b16 %v678, %v677
        %v689 = vpack.c.b16 %v680, %v679
        %v690 = vpack.c.b16 %v682, %v681
        %699 = vmatprep.subr.bf16.mxu0 0
        %700 = vmatpush1.bf16.msra.mxu0 %v683
        %701 = vmatprep.subr.bf16.mxu0 0
        %702 = vmatpush1.bf16.msra.mxu0 %v684
        %703 = vmatprep.subr.bf16.mxu0 0
        %704 = vmatpush1.bf16.msra.mxu0 %v685
        %705 = vmatprep.subr.bf16.mxu0 0
        %706 = vmatpush1.bf16.msra.mxu0 %v686
        %707 = vmatprep.subr.bf16.mxu0 0
        %708 = vmatpush1.bf16.msra.mxu0 %v687
        %709 = vmatprep.subr.bf16.mxu0 0
        %710 = vmatpush1.bf16.msra.mxu0 %v688
        %711 = vmatprep.subr.bf16.mxu0 0
        %712 = vmatpush1.bf16.msra.mxu0 %v689
        %713 = vmatprep.subr.bf16.mxu0 0
        %714 = vmatpush1.bf16.msra.mxu0 %v690
        %715 = vmatprep.subr.bf16.mxu0 0
        %716 = vmatpush1.bf16.msra.mxu0 0
        %717 = vmatprep.subr.bf16.mxu0 0
        %718 = vmatpush1.bf16.msra.mxu0 0
        %719 = vmatprep.subr.bf16.mxu0 0
        %720 = vmatpush1.bf16.msra.mxu0 0
        %721 = vmatprep.subr.bf16.mxu0 0
        %722 = vmatpush1.bf16.msra.mxu0 0
        %723 = vmatprep.subr.bf16.mxu0 0
        %724 = vmatpush1.bf16.msra.mxu0 0
        %725 = vmatprep.subr.bf16.mxu0 0
        %726 = vmatpush1.bf16.msra.mxu0 0
        %727 = vmatprep.subr.bf16.mxu0 0
        %728 = vmatpush1.bf16.msra.mxu0 0
        %729 = vmatprep.subr.bf16.mxu0 0
        %730 = vmatpush1.bf16.msra.mxu0 0
        %731 = vmatprep.mubr.bf16.mxu0 0
        %732 = vmatmul.mubr.bf16.gmra.mrb[0].mxu0 %v635
        %v733 = vpop.f32.mrb[0].mxu0
        %v734 = vadd.f32 0.0, %v733
        %v735 = vpop.f32.mrb[0].mxu0
        %v736 = vpop.f32.mrb[0].mxu0
        %v737 = vadd.f32 0.0, %v736
        %v738 = vpop.f32.mrb[0].mxu0
        %739 = vmatprep.mubr.bf16.mxu0 0
        %740 = vmatmul.mubr.bf16.gmra.mrb[0].mxu0 %v636
        %v741 = vpop.f32.mrb[0].mxu0
        %v742 = vadd.f32 0.0, %v741
        %v743 = vpop.f32.mrb[0].mxu0
        %v744 = vpop.f32.mrb[0].mxu0
        %v745 = vadd.f32 0.0, %v744
        %v746 = vpop.f32.mrb[0].mxu0
        %747 = vmatprep.mubr.bf16.mxu0 0
        %748 = vmatmul.mubr.bf16.gmra.mrb[0].mxu0 %v637
        %v749 = vpop.f32.mrb[0].mxu0
        %v750 = vadd.f32 0.0, %v749
        %v751 = vpop.f32.mrb[0].mxu0
        %v752 = vpop.f32.mrb[0].mxu0
        %v753 = vadd.f32 0.0, %v752
        %v754 = vpop.f32.mrb[0].mxu0
        %755 = vmatprep.mubr.bf16.mxu0 0
        %756 = vmatmul.mubr.bf16.gmra.mrb[0].mxu0 %v638
        %v757 = vpop.f32.mrb[0].mxu0
        %v758 = vadd.f32 0.0, %v757
        %v759 = vpop.f32.mrb[0].mxu0
        %v760 = vpop.f32.mrb[0].mxu0
        %v761 = vadd.f32 0.0, %v760
        %v762 = vpop.f32.mrb[0].mxu0
        %763 = vmatprep.mubr.bf16.mxu0 0
        %764 = vmatmul.mubr.bf16.gmra.mrb[0].mxu0 %v639
        %v765 = vpop.f32.mrb[0].mxu0
        %v766 = vadd.f32 0.0, %v765
        %v767 = vpop.f32.mrb[0].mxu0
        %v768 = vpop.f32.mrb[0].mxu0
        %v769 = vadd.f32 0.0, %v768
        %v770 = vpop.f32.mrb[0].mxu0
        %771 = vmatprep.mubr.bf16.mxu0 0
        %772 = vmatmul.mubr.bf16.gmra.mrb[0].mxu0 %v640
        %v773 = vpop.f32.mrb[0].mxu0
        %v774 = vadd.f32 0.0, %v773
        %v775 = vpop.f32.mrb[0].mxu0
        %v776 = vpop.f32.mrb[0].mxu0
        %v777 = vadd.f32 0.0, %v776
        %v778 = vpop.f32.mrb[0].mxu0
        %779 = vmatprep.mubr.bf16.mxu0 0
        %780 = vmatmul.mubr.bf16.gmra.mrb[0].mxu0 %v641
        %v781 = vpop.f32.mrb[0].mxu0
        %v782 = vadd.f32 0.0, %v781
        %v783 = vpop.f32.mrb[0].mxu0
        %v784 = vpop.f32.mrb[0].mxu0
        %v785 = vadd.f32 0.0, %v784
        %v786 = vpop.f32.mrb[0].mxu0
        %787 = vmatprep.mubr.bf16.mxu0 0
        %788 = vmatmul.mubr.bf16.gmra.mrb[0].mxu0 %v642
        %v789 = vpop.f32.mrb[0].mxu0
        %v790 = vadd.f32 0.0, %v789
        %v791 = vpop.f32.mrb[0].mxu0
        %v792 = vpop.f32.mrb[0].mxu0
        %v793 = vadd.f32 0.0, %v792
        %v794 = vpop.f32.mrb[0].mxu0
        %795 = vdwg.mxu0
        %v796 = vadd.f32 %v555, %v734
        %v797 = vadd.f32 %v556, %v737
        %v798 = vadd.f32 %v557, %v742
        %v799 = vadd.f32 %v558, %v745
        %v800 = vadd.f32 %v559, %v750
        %v801 = vadd.f32 %v560, %v753
        %v802 = vadd.f32 %v561, %v758
        %v803 = vadd.f32 %v562, %v761
        %v804 = vadd.f32 %v563, %v766
        %v805 = vadd.f32 %v564, %v769
        %v806 = vadd.f32 %v565, %v774
        %v807 = vadd.f32 %v566, %v777
        %v808 = vadd.f32 %v567, %v782
        %v809 = vadd.f32 %v568, %v785
        %v810 = vadd.f32 %v569, %v790
        %v811 = vadd.f32 %v570, %v793
        %vm812 = vcmask 64512
        %813 = vst.msk [vmem:[#allocation2] sm:$0xff] %vm812, %v796
        %814 = vst.msk [vmem:[#allocation2 + $0x8] sm:$0xff] %vm812, %v797
        %815 = vst.msk [vmem:[#allocation2 + $0x10] sm:$0xff] %vm812, %v798
        %816 = vst.msk [vmem:[#allocation2 + $0x18] sm:$0xff] %vm812, %v799
        %817 = vst.msk [vmem:[#allocation2 + $0x20] sm:$0xff] %vm812, %v800
        %818 = vst.msk [vmem:[#allocation2 + $0x28] sm:$0xff] %vm812, %v801
        %819 = vst.msk [vmem:[#allocation2 + $0x30] sm:$0xff] %vm812, %v802
        %820 = vst.msk [vmem:[#allocation2 + $0x38] sm:$0xff] %vm812, %v803
        %821 = vst.msk [vmem:[#allocation2 + $0x40] sm:$0xff] %vm812, %v804
        %822 = vst.msk [vmem:[#allocation2 + $0x48] sm:$0xff] %vm812, %v805
        %823 = vst.msk [vmem:[#allocation2 + $0x50] sm:$0xff] %vm812, %v806
        %824 = vst.msk [vmem:[#allocation2 + $0x58] sm:$0xff] %vm812, %v807
        %825 = vst.msk [vmem:[#allocation2 + $0x60] sm:$0xff] %vm812, %v808
        %826 = vst.msk [vmem:[#allocation2 + $0x68] sm:$0xff] %vm812, %v809
        %827 = vst.msk [vmem:[#allocation2 + $0x70] sm:$0xff] %vm812, %v810
        %828 = vst.msk [vmem:[#allocation2 + $0x78] sm:$0xff] %vm812, %v811
        %p829 = scmp.eq.s32.totalorder %s26, 1
        // Predicated region
        $region98: #{tpu_custom_call.1} parent=88 // pred_check
          %p830 = pneg %p829
        $region99: #{tpu_custom_call.1} parent=88 // pred_check_branch
          %832 = sbr.rel (%p830) target = $region101
        $region100: #{tpu_custom_call.1} parent=88 // pred_region
          %v833 = vld [vmem:[#allocation2] sm:$0xff]
          %v834 = vld [vmem:[#allocation2 + $0x8] sm:$0xff]
          %v835 = vld [vmem:[#allocation2 + $0x10] sm:$0xff]
          %v836 = vld [vmem:[#allocation2 + $0x18] sm:$0xff]
          %v837 = vld [vmem:[#allocation2 + $0x20] sm:$0xff]
          %v838 = vld [vmem:[#allocation2 + $0x28] sm:$0xff]
          %v839 = vld [vmem:[#allocation2 + $0x30] sm:$0xff]
          %v840 = vld [vmem:[#allocation2 + $0x38] sm:$0xff]
          %v841 = vld [vmem:[#allocation2 + $0x40] sm:$0xff]
          %v842 = vld [vmem:[#allocation2 + $0x48] sm:$0xff]
          %v843 = vld [vmem:[#allocation2 + $0x50] sm:$0xff]
          %v844 = vld [vmem:[#allocation2 + $0x58] sm:$0xff]
          %v845 = vld [vmem:[#allocation2 + $0x60] sm:$0xff]
          %v846 = vld [vmem:[#allocation2 + $0x68] sm:$0xff]
          %v847 = vld [vmem:[#allocation2 + $0x70] sm:$0xff]
          %v848 = vld [vmem:[#allocation2 + $0x78] sm:$0xff]
          %v849 = vld [vmem:[%s519] sm:$0xff]
          %v850 = vld [vmem:[%s519 + $0x8] sm:$0xff]
          %v851 = vld [vmem:[%s519 + $0x10] sm:$0xff]
          %v852 = vld [vmem:[%s519 + $0x18] sm:$0xff]
          %v853 = vld [vmem:[%s519 + $0x20] sm:$0xff]
          %v854 = vld [vmem:[%s519 + $0x28] sm:$0xff]
          %v855 = vld [vmem:[%s519 + $0x30] sm:$0xff]
          %v856 = vld [vmem:[%s519 + $0x38] sm:$0xff]
          %v857 = vld [vmem:[%s519 + $0x40] sm:$0xff]
          %v858 = vld [vmem:[%s519 + $0x48] sm:$0xff]
          %v859 = vld [vmem:[%s519 + $0x50] sm:$0xff]
          %v860 = vld [vmem:[%s519 + $0x58] sm:$0xff]
          %v861 = vld [vmem:[%s519 + $0x60] sm:$0xff]
          %v862 = vld [vmem:[%s519 + $0x68] sm:$0xff]
          %v863 = vld [vmem:[%s519 + $0x70] sm:$0xff]
          %v864 = vld [vmem:[%s519 + $0x78] sm:$0xff]
          %866 = vset.pattern.permute.xlu0 0
          %867 = vperm.xlu0 %866, %v849
          %v868 = vpop.permute.xlu0 %867
          %871 = vset.pattern.permute.xlu0 0
          %872 = vperm.xlu0 %871, %v850
          %v873 = vpop.permute.xlu0 %872
          %876 = vset.pattern.permute.xlu0 0
          %877 = vperm.xlu0 %876, %v851
          %v878 = vpop.permute.xlu0 %877
          %881 = vset.pattern.permute.xlu0 0
          %882 = vperm.xlu0 %881, %v852
          %v883 = vpop.permute.xlu0 %882
          %886 = vset.pattern.permute.xlu0 0
          %887 = vperm.xlu0 %886, %v853
          %v888 = vpop.permute.xlu0 %887
          %891 = vset.pattern.permute.xlu0 0
          %892 = vperm.xlu0 %891, %v854
          %v893 = vpop.permute.xlu0 %892
          %896 = vset.pattern.permute.xlu0 0
          %897 = vperm.xlu0 %896, %v855
          %v898 = vpop.permute.xlu0 %897
          %901 = vset.pattern.permute.xlu0 0
          %902 = vperm.xlu0 %901, %v856
          %v903 = vpop.permute.xlu0 %902
          %906 = vset.pattern.permute.xlu0 0
          %907 = vperm.xlu0 %906, %v857
          %v908 = vpop.permute.xlu0 %907
          %911 = vset.pattern.permute.xlu0 0
          %912 = vperm.xlu0 %911, %v858
          %v913 = vpop.permute.xlu0 %912
          %916 = vset.pattern.permute.xlu0 0
          %917 = vperm.xlu0 %916, %v859
          %v918 = vpop.permute.xlu0 %917
          %921 = vset.pattern.permute.xlu0 0
          %922 = vperm.xlu0 %921, %v860
          %v923 = vpop.permute.xlu0 %922
          %926 = vset.pattern.permute.xlu0 0
          %927 = vperm.xlu0 %926, %v861
          %v928 = vpop.permute.xlu0 %927
          %931 = vset.pattern.permute.xlu0 0
          %932 = vperm.xlu0 %931, %v862
          %v933 = vpop.permute.xlu0 %932
          %936 = vset.pattern.permute.xlu0 0
          %937 = vperm.xlu0 %936, %v863
          %v938 = vpop.permute.xlu0 %937
          %941 = vset.pattern.permute.xlu0 0
          %942 = vperm.xlu0 %941, %v864
          %v943 = vpop.permute.xlu0 %942
          %v945 = vmul.f32 %v833, %v868
          %v946 = vmul.f32 %v834, %v873
          %v947 = vmul.f32 %v835, %v878
          %v948 = vmul.f32 %v836, %v883
          %v949 = vmul.f32 %v837, %v888
          %v950 = vmul.f32 %v838, %v893
          %v951 = vmul.f32 %v839, %v898
          %v952 = vmul.f32 %v840, %v903
          %v953 = vmul.f32 %v841, %v908
          %v954 = vmul.f32 %v842, %v913
          %v955 = vmul.f32 %v843, %v918
          %v956 = vmul.f32 %v844, %v923
          %v957 = vmul.f32 %v845, %v928
          %v958 = vmul.f32 %v846, %v933
          %v959 = vmul.f32 %v847, %v938
          %v960 = vmul.f32 %v848, %v943
          %v961 = vld [vmem:[%s4] sm:$0xff]
          %v962 = vld [vmem:[%s5] sm:$0x1]
          %v964 = vlaneseq
          %v965 = vshrl.u32 %v964, 7
          %v966 = vsub.s32 0, %v965
          %v967 = vrot.slane %v962, %v966
          %v970 = vsel %vm812, %v945, 0
          %v973 = vsel %vm812, %v946, 0
          %v976 = vsel %vm812, %v947, 0
          %v979 = vsel %vm812, %v948, 0
          %v982 = vsel %vm812, %v949, 0
          %v985 = vsel %vm812, %v950, 0
          %v988 = vsel %vm812, %v951, 0
          %v991 = vsel %vm812, %v952, 0
          %v994 = vsel %vm812, %v953, 0
          %v997 = vsel %vm812, %v954, 0
          %v1000 = vsel %vm812, %v955, 0
          %v1003 = vsel %vm812, %v956, 0
          %v1006 = vsel %vm812, %v957, 0
          %v1009 = vsel %vm812, %v958, 0
          %v1012 = vsel %vm812, %v959, 0
          %v1015 = vsel %vm812, %v960, 0
          %1017 = vmatprep.subr.mxu0 0.0
          %1018 = vmatpush1.msra.mxu0 %v961
          %1019 = vmatprep.subr.mxu0 0.0
          %1020 = vmatpush1.msra.mxu0 0.0
          %1021 = vmatprep.subr.mxu0 0.0
          %1022 = vmatpush1.msra.mxu0 0.0
          %1023 = vmatprep.subr.mxu0 0.0
          %1024 = vmatpush1.msra.mxu0 0.0
          %1025 = vmatprep.subr.mxu0 0.0
          %1026 = vmatpush1.msra.mxu0 0.0
          %1027 = vmatprep.subr.mxu0 0.0
          %1028 = vmatpush1.msra.mxu0 0.0
          %1029 = vmatprep.subr.mxu0 0.0
          %1030 = vmatpush1.msra.mxu0 0.0
          %1031 = vmatprep.subr.mxu0 0.0
          %1032 = vmatpush1.msra.mxu0 0.0
          %1033 = vmatprep.subr.mxu0 0.0
          %1034 = vmatpush1.msra.mxu0 0.0
          %1035 = vmatprep.subr.mxu0 0.0
          %1036 = vmatpush1.msra.mxu0 0.0
          %1037 = vmatprep.subr.mxu0 0.0
          %1038 = vmatpush1.msra.mxu0 0.0
          %1039 = vmatprep.subr.mxu0 0.0
          %1040 = vmatpush1.msra.mxu0 0.0
          %1041 = vmatprep.subr.mxu0 0.0
          %1042 = vmatpush1.msra.mxu0 0.0
          %1043 = vmatprep.subr.mxu0 0.0
          %1044 = vmatpush1.msra.mxu0 0.0
          %1045 = vmatprep.subr.mxu0 0.0
          %1046 = vmatpush1.msra.mxu0 0.0
          %1047 = vmatprep.subr.mxu0 0.0
          %1048 = vmatpush1.msra.mxu0 0.0
          %1049 = vmatprep.subr.mxu0 0.0
          %1050 = vmatpush1.msra.mxu0 0.0
          %1051 = vmatprep.subr.mxu0 0.0
          %1052 = vmatpush1.msra.mxu0 0.0
          %1053 = vmatprep.subr.mxu0 0.0
          %1054 = vmatpush1.msra.mxu0 0.0
          %1055 = vmatprep.subr.mxu0 0.0
          %1056 = vmatpush1.msra.mxu0 0.0
          %1057 = vmatprep.subr.mxu0 0.0
          %1058 = vmatpush1.msra.mxu0 0.0
          %1059 = vmatprep.subr.mxu0 0.0
          %1060 = vmatpush1.msra.mxu0 0.0
          %1061 = vmatprep.subr.mxu0 0.0
          %1062 = vmatpush1.msra.mxu0 0.0
          %1063 = vmatprep.subr.mxu0 0.0
          %1064 = vmatpush1.msra.mxu0 0.0
          %1065 = vmatprep.subr.mxu0 0.0
          %1066 = vmatpush1.msra.mxu0 0.0
          %1067 = vmatprep.subr.mxu0 0.0
          %1068 = vmatpush1.msra.mxu0 0.0
          %1069 = vmatprep.subr.mxu0 0.0
          %1070 = vmatpush1.msra.mxu0 0.0
          %1071 = vmatprep.subr.mxu0 0.0
          %1072 = vmatpush1.msra.mxu0 0.0
          %1073 = vmatprep.subr.mxu0 0.0
          %1074 = vmatpush1.msra.mxu0 0.0
          %1075 = vmatprep.subr.mxu0 0.0
          %1076 = vmatpush1.msra.mxu0 0.0
          %1077 = vmatprep.subr.mxu0 0.0
          %1078 = vmatpush1.msra.mxu0 0.0
          %1079 = vmatprep.subr.mxu0 0.0
          %1080 = vmatpush1.msra.mxu0 0.0
          %1081 = vmatprep.mubr.f32.mxu0 0.0
          %1082 = vmatmul.mubr.f32.gmra.mrb[0].mxu0 %v970
          %v1083 = vpop.f32.mrb[0].mxu0
          %v1084 = vadd.f32 %v967, %v1083
          %v1085 = vpop.f32.mrb[0].mxu0
          %1086 = vmatprep.mubr.f32.mxu0 0.0
          %1087 = vmatmul.mubr.f32.gmra.mrb[0].mxu0 %v973
          %v1088 = vpop.f32.mrb[0].mxu0
          %v1089 = vadd.f32 %v967, %v1088
          %v1090 = vpop.f32.mrb[0].mxu0
          %1091 = vmatprep.mubr.f32.mxu0 0.0
          %1092 = vmatmul.mubr.f32.gmra.mrb[0].mxu0 %v976
          %v1093 = vpop.f32.mrb[0].mxu0
          %v1094 = vadd.f32 %v967, %v1093
          %v1095 = vpop.f32.mrb[0].mxu0
          %1096 = vmatprep.mubr.f32.mxu0 0.0
          %1097 = vmatmul.mubr.f32.gmra.mrb[0].mxu0 %v979
          %v1098 = vpop.f32.mrb[0].mxu0
          %v1099 = vadd.f32 %v967, %v1098
          %v1100 = vpop.f32.mrb[0].mxu0
          %1101 = vmatprep.mubr.f32.mxu0 0.0
          %1102 = vmatmul.mubr.f32.gmra.mrb[0].mxu0 %v982
          %v1103 = vpop.f32.mrb[0].mxu0
          %v1104 = vadd.f32 %v967, %v1103
          %v1105 = vpop.f32.mrb[0].mxu0
          %1106 = vmatprep.mubr.f32.mxu0 0.0
          %1107 = vmatmul.mubr.f32.gmra.mrb[0].mxu0 %v985
          %v1108 = vpop.f32.mrb[0].mxu0
          %v1109 = vadd.f32 %v967, %v1108
          %v1110 = vpop.f32.mrb[0].mxu0
          %1111 = vmatprep.mubr.f32.mxu0 0.0
          %1112 = vmatmul.mubr.f32.gmra.mrb[0].mxu0 %v988
          %v1113 = vpop.f32.mrb[0].mxu0
          %v1114 = vadd.f32 %v967, %v1113
          %v1115 = vpop.f32.mrb[0].mxu0
          %1116 = vmatprep.mubr.f32.mxu0 0.0
          %1117 = vmatmul.mubr.f32.gmra.mrb[0].mxu0 %v991
          %v1118 = vpop.f32.mrb[0].mxu0
          %v1119 = vadd.f32 %v967, %v1118
          %v1120 = vpop.f32.mrb[0].mxu0
          %1121 = vmatprep.mubr.f32.mxu0 0.0
          %1122 = vmatmul.mubr.f32.gmra.mrb[0].mxu0 %v994
          %v1123 = vpop.f32.mrb[0].mxu0
          %v1124 = vadd.f32 %v967, %v1123
          %v1125 = vpop.f32.mrb[0].mxu0
          %1126 = vmatprep.mubr.f32.mxu0 0.0
          %1127 = vmatmul.mubr.f32.gmra.mrb[0].mxu0 %v997
          %v1128 = vpop.f32.mrb[0].mxu0
          %v1129 = vadd.f32 %v967, %v1128
          %v1130 = vpop.f32.mrb[0].mxu0
          %1131 = vmatprep.mubr.f32.mxu0 0.0
          %1132 = vmatmul.mubr.f32.gmra.mrb[0].mxu0 %v1000
          %v1133 = vpop.f32.mrb[0].mxu0
          %v1134 = vadd.f32 %v967, %v1133
          %v1135 = vpop.f32.mrb[0].mxu0
          %1136 = vmatprep.mubr.f32.mxu0 0.0
          %1137 = vmatmul.mubr.f32.gmra.mrb[0].mxu0 %v1003
          %v1138 = vpop.f32.mrb[0].mxu0
          %v1139 = vadd.f32 %v967, %v1138
          %v1140 = vpop.f32.mrb[0].mxu0
          %1141 = vmatprep.mubr.f32.mxu0 0.0
          %1142 = vmatmul.mubr.f32.gmra.mrb[0].mxu0 %v1006
          %v1143 = vpop.f32.mrb[0].mxu0
          %v1144 = vadd.f32 %v967, %v1143
          %v1145 = vpop.f32.mrb[0].mxu0
          %1146 = vmatprep.mubr.f32.mxu0 0.0
          %1147 = vmatmul.mubr.f32.gmra.mrb[0].mxu0 %v1009
          %v1148 = vpop.f32.mrb[0].mxu0
          %v1149 = vadd.f32 %v967, %v1148
          %v1150 = vpop.f32.mrb[0].mxu0
          %1151 = vmatprep.mubr.f32.mxu0 0.0
          %1152 = vmatmul.mubr.f32.gmra.mrb[0].mxu0 %v1012
          %v1153 = vpop.f32.mrb[0].mxu0
          %v1154 = vadd.f32 %v967, %v1153
          %v1155 = vpop.f32.mrb[0].mxu0
          %1156 = vmatprep.mubr.f32.mxu0 0.0
          %1157 = vmatmul.mubr.f32.gmra.mrb[0].mxu0 %v1015
          %v1158 = vpop.f32.mrb[0].mxu0
          %v1159 = vadd.f32 %v967, %v1158
          %v1160 = vpop.f32.mrb[0].mxu0
          %1161 = vdwg.mxu0
          %v1162 = vld [vmem:[%s513] sm:$0xff]
          %v1163 = vld [vmem:[%s513 + $0x8] sm:$0xff]
          %v1164 = vld [vmem:[%s513 + $0x10] sm:$0xff]
          %v1165 = vld [vmem:[%s513 + $0x18] sm:$0xff]
          %v1166 = vld [vmem:[%s513 + $0x20] sm:$0xff]
          %v1167 = vld [vmem:[%s513 + $0x28] sm:$0xff]
          %v1168 = vld [vmem:[%s513 + $0x30] sm:$0xff]
          %v1169 = vld [vmem:[%s513 + $0x38] sm:$0xff]
          %v1170 = vld [vmem:[%s513 + $0x40] sm:$0xff]
          %v1171 = vld [vmem:[%s513 + $0x48] sm:$0xff]
          %v1172 = vld [vmem:[%s513 + $0x50] sm:$0xff]
          %v1173 = vld [vmem:[%s513 + $0x58] sm:$0xff]
          %v1174 = vld [vmem:[%s513 + $0x60] sm:$0xff]
          %v1175 = vld [vmem:[%s513 + $0x68] sm:$0xff]
          %v1176 = vld [vmem:[%s513 + $0x70] sm:$0xff]
          %v1177 = vld [vmem:[%s513 + $0x78] sm:$0xff]
          %v1178 = vld [vmem:[%s6] sm:$0xff]
          %v1180 = vsel %vm812, %v1162, 0
          %v1183 = vsel %vm812, %v1163, 0
          %v1186 = vsel %vm812, %v1164, 0
          %v1189 = vsel %vm812, %v1165, 0
          %v1192 = vsel %vm812, %v1166, 0
          %v1195 = vsel %vm812, %v1167, 0
          %v1198 = vsel %vm812, %v1168, 0
          %v1201 = vsel %vm812, %v1169, 0
          %v1204 = vsel %vm812, %v1170, 0
          %v1207 = vsel %vm812, %v1171, 0
          %v1210 = vsel %vm812, %v1172, 0
          %v1213 = vsel %vm812, %v1173, 0
          %v1216 = vsel %vm812, %v1174, 0
          %v1219 = vsel %vm812, %v1175, 0
          %v1222 = vsel %vm812, %v1176, 0
          %v1225 = vsel %vm812, %v1177, 0
          %1227 = vmatprep.subr.mxu0 0.0
          %1228 = vmatpush1.msra.mxu0 %v1178
          %1229 = vmatprep.subr.mxu0 0.0
          %1230 = vmatpush1.msra.mxu0 0.0
          %1231 = vmatprep.subr.mxu0 0.0
          %1232 = vmatpush1.msra.mxu0 0.0
          %1233 = vmatprep.subr.mxu0 0.0
          %1234 = vmatpush1.msra.mxu0 0.0
          %1235 = vmatprep.subr.mxu0 0.0
          %1236 = vmatpush1.msra.mxu0 0.0
          %1237 = vmatprep.subr.mxu0 0.0
          %1238 = vmatpush1.msra.mxu0 0.0
          %1239 = vmatprep.subr.mxu0 0.0
          %1240 = vmatpush1.msra.mxu0 0.0
          %1241 = vmatprep.subr.mxu0 0.0
          %1242 = vmatpush1.msra.mxu0 0.0
          %1243 = vmatprep.subr.mxu0 0.0
          %1244 = vmatpush1.msra.mxu0 0.0
          %1245 = vmatprep.subr.mxu0 0.0
          %1246 = vmatpush1.msra.mxu0 0.0
          %1247 = vmatprep.subr.mxu0 0.0
          %1248 = vmatpush1.msra.mxu0 0.0
          %1249 = vmatprep.subr.mxu0 0.0
          %1250 = vmatpush1.msra.mxu0 0.0
          %1251 = vmatprep.subr.mxu0 0.0
          %1252 = vmatpush1.msra.mxu0 0.0
          %1253 = vmatprep.subr.mxu0 0.0
          %1254 = vmatpush1.msra.mxu0 0.0
          %1255 = vmatprep.subr.mxu0 0.0
          %1256 = vmatpush1.msra.mxu0 0.0
          %1257 = vmatprep.subr.mxu0 0.0
          %1258 = vmatpush1.msra.mxu0 0.0
          %1259 = vmatprep.subr.mxu0 0.0
          %1260 = vmatpush1.msra.mxu0 0.0
          %1261 = vmatprep.subr.mxu0 0.0
          %1262 = vmatpush1.msra.mxu0 0.0
          %1263 = vmatprep.subr.mxu0 0.0
          %1264 = vmatpush1.msra.mxu0 0.0
          %1265 = vmatprep.subr.mxu0 0.0
          %1266 = vmatpush1.msra.mxu0 0.0
          %1267 = vmatprep.subr.mxu0 0.0
          %1268 = vmatpush1.msra.mxu0 0.0
          %1269 = vmatprep.subr.mxu0 0.0
          %1270 = vmatpush1.msra.mxu0 0.0
          %1271 = vmatprep.subr.mxu0 0.0
          %1272 = vmatpush1.msra.mxu0 0.0
          %1273 = vmatprep.subr.mxu0 0.0
          %1274 = vmatpush1.msra.mxu0 0.0
          %1275 = vmatprep.subr.mxu0 0.0
          %1276 = vmatpush1.msra.mxu0 0.0
          %1277 = vmatprep.subr.mxu0 0.0
          %1278 = vmatpush1.msra.mxu0 0.0
          %1279 = vmatprep.subr.mxu0 0.0
          %1280 = vmatpush1.msra.mxu0 0.0
          %1281 = vmatprep.subr.mxu0 0.0
          %1282 = vmatpush1.msra.mxu0 0.0
          %1283 = vmatprep.subr.mxu0 0.0
          %1284 = vmatpush1.msra.mxu0 0.0
          %1285 = vmatprep.subr.mxu0 0.0
          %1286 = vmatpush1.msra.mxu0 0.0
          %1287 = vmatprep.subr.mxu0 0.0
          %1288 = vmatpush1.msra.mxu0 0.0
          %1289 = vmatprep.subr.mxu0 0.0
          %1290 = vmatpush1.msra.mxu0 0.0
          %1291 = vmatprep.mubr.f32.mxu0 0.0
          %1292 = vmatmul.mubr.f32.gmra.mrb[0].mxu0 %v1180
          %v1293 = vpop.f32.mrb[0].mxu0
          %v1294 = vadd.f32 0.0, %v1293
          %v1295 = vpop.f32.mrb[0].mxu0
          %1296 = vmatprep.mubr.f32.mxu0 0.0
          %1297 = vmatmul.mubr.f32.gmra.mrb[0].mxu0 %v1183
          %v1298 = vpop.f32.mrb[0].mxu0
          %v1299 = vadd.f32 0.0, %v1298
          %v1300 = vpop.f32.mrb[0].mxu0
          %1301 = vmatprep.mubr.f32.mxu0 0.0
          %1302 = vmatmul.mubr.f32.gmra.mrb[0].mxu0 %v1186
          %v1303 = vpop.f32.mrb[0].mxu0
          %v1304 = vadd.f32 0.0, %v1303
          %v1305 = vpop.f32.mrb[0].mxu0
          %1306 = vmatprep.mubr.f32.mxu0 0.0
          %1307 = vmatmul.mubr.f32.gmra.mrb[0].mxu0 %v1189
          %v1308 = vpop.f32.mrb[0].mxu0
          %v1309 = vadd.f32 0.0, %v1308
          %v1310 = vpop.f32.mrb[0].mxu0
          %1311 = vmatprep.mubr.f32.mxu0 0.0
          %1312 = vmatmul.mubr.f32.gmra.mrb[0].mxu0 %v1192
          %v1313 = vpop.f32.mrb[0].mxu0
          %v1314 = vadd.f32 0.0, %v1313
          %v1315 = vpop.f32.mrb[0].mxu0
          %1316 = vmatprep.mubr.f32.mxu0 0.0
          %1317 = vmatmul.mubr.f32.gmra.mrb[0].mxu0 %v1195
          %v1318 = vpop.f32.mrb[0].mxu0
          %v1319 = vadd.f32 0.0, %v1318
          %v1320 = vpop.f32.mrb[0].mxu0
          %1321 = vmatprep.mubr.f32.mxu0 0.0
          %1322 = vmatmul.mubr.f32.gmra.mrb[0].mxu0 %v1198
          %v1323 = vpop.f32.mrb[0].mxu0
          %v1324 = vadd.f32 0.0, %v1323
          %v1325 = vpop.f32.mrb[0].mxu0
          %1326 = vmatprep.mubr.f32.mxu0 0.0
          %1327 = vmatmul.mubr.f32.gmra.mrb[0].mxu0 %v1201
          %v1328 = vpop.f32.mrb[0].mxu0
          %v1329 = vadd.f32 0.0, %v1328
          %v1330 = vpop.f32.mrb[0].mxu0
          %1331 = vmatprep.mubr.f32.mxu0 0.0
          %1332 = vmatmul.mubr.f32.gmra.mrb[0].mxu0 %v1204
          %v1333 = vpop.f32.mrb[0].mxu0
          %v1334 = vadd.f32 0.0, %v1333
          %v1335 = vpop.f32.mrb[0].mxu0
          %1336 = vmatprep.mubr.f32.mxu0 0.0
          %1337 = vmatmul.mubr.f32.gmra.mrb[0].mxu0 %v1207
          %v1338 = vpop.f32.mrb[0].mxu0
          %v1339 = vadd.f32 0.0, %v1338
          %v1340 = vpop.f32.mrb[0].mxu0
          %1341 = vmatprep.mubr.f32.mxu0 0.0
          %1342 = vmatmul.mubr.f32.gmra.mrb[0].mxu0 %v1210
          %v1343 = vpop.f32.mrb[0].mxu0
          %v1344 = vadd.f32 0.0, %v1343
          %v1345 = vpop.f32.mrb[0].mxu0
          %1346 = vmatprep.mubr.f32.mxu0 0.0
          %1347 = vmatmul.mubr.f32.gmra.mrb[0].mxu0 %v1213
          %v1348 = vpop.f32.mrb[0].mxu0
          %v1349 = vadd.f32 0.0, %v1348
          %v1350 = vpop.f32.mrb[0].mxu0
          %1351 = vmatprep.mubr.f32.mxu0 0.0
          %1352 = vmatmul.mubr.f32.gmra.mrb[0].mxu0 %v1216
          %v1353 = vpop.f32.mrb[0].mxu0
          %v1354 = vadd.f32 0.0, %v1353
          %v1355 = vpop.f32.mrb[0].mxu0
          %1356 = vmatprep.mubr.f32.mxu0 0.0
          %1357 = vmatmul.mubr.f32.gmra.mrb[0].mxu0 %v1219
          %v1358 = vpop.f32.mrb[0].mxu0
          %v1359 = vadd.f32 0.0, %v1358
          %v1360 = vpop.f32.mrb[0].mxu0
          %1361 = vmatprep.mubr.f32.mxu0 0.0
          %1362 = vmatmul.mubr.f32.gmra.mrb[0].mxu0 %v1222
          %v1363 = vpop.f32.mrb[0].mxu0
          %v1364 = vadd.f32 0.0, %v1363
          %v1365 = vpop.f32.mrb[0].mxu0
          %1366 = vmatprep.mubr.f32.mxu0 0.0
          %1367 = vmatmul.mubr.f32.gmra.mrb[0].mxu0 %v1225
          %v1368 = vpop.f32.mrb[0].mxu0
          %v1369 = vadd.f32 0.0, %v1368
          %v1370 = vpop.f32.mrb[0].mxu0
          %1371 = vdwg.mxu0
          %v1372 = vadd.f32 %v1084, %v1294
          %v1373 = vadd.f32 %v1089, %v1299
          %v1374 = vadd.f32 %v1094, %v1304
          %v1375 = vadd.f32 %v1099, %v1309
          %v1376 = vadd.f32 %v1104, %v1314
          %v1377 = vadd.f32 %v1109, %v1319
          %v1378 = vadd.f32 %v1114, %v1324
          %v1379 = vadd.f32 %v1119, %v1329
          %v1380 = vadd.f32 %v1124, %v1334
          %v1381 = vadd.f32 %v1129, %v1339
          %v1382 = vadd.f32 %v1134, %v1344
          %v1383 = vadd.f32 %v1139, %v1349
          %v1384 = vadd.f32 %v1144, %v1354
          %v1385 = vadd.f32 %v1149, %v1359
          %v1386 = vadd.f32 %v1154, %v1364
          %v1387 = vadd.f32 %v1159, %v1369
          %v1388 = vmul.f32 %v1372, %v1372
          %v1389 = vmul.f32 %v1373, %v1373
          %v1390 = vmul.f32 %v1374, %v1374
          %v1391 = vmul.f32 %v1375, %v1375
          %v1392 = vmul.f32 %v1376, %v1376
          %v1393 = vmul.f32 %v1377, %v1377
          %v1394 = vmul.f32 %v1378, %v1378
          %v1395 = vmul.f32 %v1379, %v1379
          %v1396 = vmul.f32 %v1380, %v1380
          %v1397 = vmul.f32 %v1381, %v1381
          %v1398 = vmul.f32 %v1382, %v1382
          %v1399 = vmul.f32 %v1383, %v1383
          %v1400 = vmul.f32 %v1384, %v1384
          %v1401 = vmul.f32 %v1385, %v1385
          %v1402 = vmul.f32 %v1386, %v1386
          %v1403 = vmul.f32 %v1387, %v1387
          %vm1404 = vcmask 261120
          %v1405 = vsel %vm1404, %v1388, 0.0
          %1406 = vadd.xlane.f32.xlu0 %v1405
          %v1407 = vpop.xlane.xlu0 %1406
          %v1408 = vsel %vm1404, %v1389, 0.0
          %1409 = vadd.xlane.f32.xlu0 %v1408
          %v1410 = vpop.xlane.xlu0 %1409
          %v1411 = vsel %vm1404, %v1390, 0.0
          %1412 = vadd.xlane.f32.xlu0 %v1411
          %v1413 = vpop.xlane.xlu0 %1412
          %v1414 = vsel %vm1404, %v1391, 0.0
          %1415 = vadd.xlane.f32.xlu0 %v1414
          %v1416 = vpop.xlane.xlu0 %1415
          %v1417 = vsel %vm1404, %v1392, 0.0
          %1418 = vadd.xlane.f32.xlu0 %v1417
          %v1419 = vpop.xlane.xlu0 %1418
          %v1420 = vsel %vm1404, %v1393, 0.0
          %1421 = vadd.xlane.f32.xlu0 %v1420
          %v1422 = vpop.xlane.xlu0 %1421
          %v1423 = vsel %vm1404, %v1394, 0.0
          %1424 = vadd.xlane.f32.xlu0 %v1423
          %v1425 = vpop.xlane.xlu0 %1424
          %v1426 = vsel %vm1404, %v1395, 0.0
          %1427 = vadd.xlane.f32.xlu0 %v1426
          %v1428 = vpop.xlane.xlu0 %1427
          %v1429 = vsel %vm1404, %v1396, 0.0
          %1430 = vadd.xlane.f32.xlu0 %v1429
          %v1431 = vpop.xlane.xlu0 %1430
          %v1432 = vsel %vm1404, %v1397, 0.0
          %1433 = vadd.xlane.f32.xlu0 %v1432
          %v1434 = vpop.xlane.xlu0 %1433
          %v1435 = vsel %vm1404, %v1398, 0.0
          %1436 = vadd.xlane.f32.xlu0 %v1435
          %v1437 = vpop.xlane.xlu0 %1436
          %v1438 = vsel %vm1404, %v1399, 0.0
          %1439 = vadd.xlane.f32.xlu0 %v1438
          %v1440 = vpop.xlane.xlu0 %1439
          %v1441 = vsel %vm1404, %v1400, 0.0
          %1442 = vadd.xlane.f32.xlu0 %v1441
          %v1443 = vpop.xlane.xlu0 %1442
          %v1444 = vsel %vm1404, %v1401, 0.0
          %1445 = vadd.xlane.f32.xlu0 %v1444
          %v1446 = vpop.xlane.xlu0 %1445
          %v1447 = vsel %vm1404, %v1402, 0.0
          %1448 = vadd.xlane.f32.xlu0 %v1447
          %v1449 = vpop.xlane.xlu0 %1448
          %v1450 = vsel %vm1404, %v1403, 0.0
          %1451 = vadd.xlane.f32.xlu0 %v1450
          %v1452 = vpop.xlane.xlu0 %1451
          %v1453 = vmax.f32 %v1407, 1e-24
          %v1454 = vmax.f32 %v1410, 1e-24
          %v1455 = vmax.f32 %v1413, 1e-24
          %v1456 = vmax.f32 %v1416, 1e-24
          %v1457 = vmax.f32 %v1419, 1e-24
          %v1458 = vmax.f32 %v1422, 1e-24
          %v1459 = vmax.f32 %v1425, 1e-24
          %v1460 = vmax.f32 %v1428, 1e-24
          %v1461 = vmax.f32 %v1431, 1e-24
          %v1462 = vmax.f32 %v1434, 1e-24
          %v1463 = vmax.f32 %v1437, 1e-24
          %v1464 = vmax.f32 %v1440, 1e-24
          %v1465 = vmax.f32 %v1443, 1e-24
          %v1466 = vmax.f32 %v1446, 1e-24
          %v1467 = vmax.f32 %v1449, 1e-24
          %v1468 = vmax.f32 %v1452, 1e-24
          %v1469 = vrsqrt.pop %v1453
          %v1470 = vrsqrt.pop %v1454
          %v1471 = vrsqrt.pop %v1455
          %v1472 = vrsqrt.pop %v1456
          %v1473 = vrsqrt.pop %v1457
          %v1474 = vrsqrt.pop %v1458
          %v1475 = vrsqrt.pop %v1459
          %v1476 = vrsqrt.pop %v1460
          %v1477 = vrsqrt.pop %v1461
          %v1478 = vrsqrt.pop %v1462
          %v1479 = vrsqrt.pop %v1463
          %v1480 = vrsqrt.pop %v1464
          %v1481 = vrsqrt.pop %v1465
          %v1482 = vrsqrt.pop %v1466
          %v1483 = vrsqrt.pop %v1467
          %v1484 = vrsqrt.pop %v1468
          %v1485 = vmul.f32 %v1372, %v1469
          %v1486 = vmul.f32 %v1373, %v1470
          %v1487 = vmul.f32 %v1374, %v1471
          %v1488 = vmul.f32 %v1375, %v1472
          %v1489 = vmul.f32 %v1376, %v1473
          %v1490 = vmul.f32 %v1377, %v1474
          %v1491 = vmul.f32 %v1378, %v1475
          %v1492 = vmul.f32 %v1379, %v1476
          %v1493 = vmul.f32 %v1380, %v1477
          %v1494 = vmul.f32 %v1381, %v1478
          %v1495 = vmul.f32 %v1382, %v1479
          %v1496 = vmul.f32 %v1383, %v1480
          %v1497 = vmul.f32 %v1384, %v1481
          %v1498 = vmul.f32 %v1385, %v1482
          %v1499 = vmul.f32 %v1386, %v1483
          %v1500 = vmul.f32 %v1387, %v1484
          %v1501 = vmax.f32 %v1485, 0.0
          %v1502 = vmax.f32 %v1486, 0.0
          %v1503 = vmax.f32 %v1487, 0.0
          %v1504 = vmax.f32 %v1488, 0.0
          %v1505 = vmax.f32 %v1489, 0.0
          %v1506 = vmax.f32 %v1490, 0.0
          %v1507 = vmax.f32 %v1491, 0.0
          %v1508 = vmax.f32 %v1492, 0.0
          %v1509 = vmax.f32 %v1493, 0.0
          %v1510 = vmax.f32 %v1494, 0.0
          %v1511 = vmax.f32 %v1495, 0.0
          %v1512 = vmax.f32 %v1496, 0.0
          %v1513 = vmax.f32 %v1497, 0.0
          %v1514 = vmax.f32 %v1498, 0.0
          %v1515 = vmax.f32 %v1499, 0.0
          %v1516 = vmax.f32 %v1500, 0.0
          %1517 = vst.msk [vmem:[%s525] sm:$0xff] %vm1404, %v1501
          %1518 = vst.msk [vmem:[%s525 + $0x8] sm:$0xff] %vm1404, %v1502
          %1519 = vst.msk [vmem:[%s525 + $0x10] sm:$0xff] %vm1404, %v1503
          %1520 = vst.msk [vmem:[%s525 + $0x18] sm:$0xff] %vm1404, %v1504
          %1521 = vst.msk [vmem:[%s525 + $0x20] sm:$0xff] %vm1404, %v1505
          %1522 = vst.msk [vmem:[%s525 + $0x28] sm:$0xff] %vm1404, %v1506
          %1523 = vst.msk [vmem:[%s525 + $0x30] sm:$0xff] %vm1404, %v1507
          %1524 = vst.msk [vmem:[%s525 + $0x38] sm:$0xff] %vm1404, %v1508
          %1525 = vst.msk [vmem:[%s525 + $0x40] sm:$0xff] %vm1404, %v1509
          %1526 = vst.msk [vmem:[%s525 + $0x48] sm:$0xff] %vm1404, %v1510
          %1527 = vst.msk [vmem:[%s525 + $0x50] sm:$0xff] %vm1404, %v1511
          %1528 = vst.msk [vmem:[%s525 + $0x58] sm:$0xff] %vm1404, %v1512
          %1529 = vst.msk [vmem:[%s525 + $0x60] sm:$0xff] %vm1404, %v1513
          %1530 = vst.msk [vmem:[%s525 + $0x68] sm:$0xff] %vm1404, %v1514
          %1531 = vst.msk [vmem:[%s525 + $0x70] sm:$0xff] %vm1404, %v1515
          %1532 = vst.msk [vmem:[%s525 + $0x78] sm:$0xff] %vm1404, %v1516
          %v1533 = vld [vmem:[%s7] sm:$0xff]
          %v1534 = vld [vmem:[%s7 + $0x8] sm:$0xff]
          %v1535 = vld [vmem:[%s7 + $0x10] sm:$0xff]
          %v1536 = vld [vmem:[%s7 + $0x18] sm:$0xff]
          %v1538 = vsel %vm1404, %v1501, 0
          %v1541 = vsel %vm1404, %v1502, 0
          %v1544 = vsel %vm1404, %v1503, 0
          %v1547 = vsel %vm1404, %v1504, 0
          %v1550 = vsel %vm1404, %v1505, 0
          %v1553 = vsel %vm1404, %v1506, 0
          %v1556 = vsel %vm1404, %v1507, 0
          %v1559 = vsel %vm1404, %v1508, 0
          %v1562 = vsel %vm1404, %v1509, 0
          %v1565 = vsel %vm1404, %v1510, 0
          %v1568 = vsel %vm1404, %v1511, 0
          %v1571 = vsel %vm1404, %v1512, 0
          %v1574 = vsel %vm1404, %v1513, 0
          %v1577 = vsel %vm1404, %v1514, 0
          %v1580 = vsel %vm1404, %v1515, 0
          %v1583 = vsel %vm1404, %v1516, 0
          %1585 = vmatprep.subr.mxu0 0.0
          %1586 = vmatpush1.msra.mxu0 %v1533
          %1587 = vmatprep.subr.mxu0 0.0
          %1588 = vmatpush1.msra.mxu0 %v1534
          %1589 = vmatprep.subr.mxu0 0.0
          %1590 = vmatpush1.msra.mxu0 %v1535
          %1591 = vmatprep.subr.mxu0 0.0
          %1592 = vmatpush1.msra.mxu0 %v1536
          %1593 = vmatprep.subr.mxu0 0.0
          %1594 = vmatpush1.msra.mxu0 0.0
          %1595 = vmatprep.subr.mxu0 0.0
          %1596 = vmatpush1.msra.mxu0 0.0
          %1597 = vmatprep.subr.mxu0 0.0
          %1598 = vmatpush1.msra.mxu0 0.0
          %1599 = vmatprep.subr.mxu0 0.0
          %1600 = vmatpush1.msra.mxu0 0.0
          %1601 = vmatprep.subr.mxu0 0.0
          %1602 = vmatpush1.msra.mxu0 0.0
          %1603 = vmatprep.subr.mxu0 0.0
          %1604 = vmatpush1.msra.mxu0 0.0
          %1605 = vmatprep.subr.mxu0 0.0
          %1606 = vmatpush1.msra.mxu0 0.0
          %1607 = vmatprep.subr.mxu0 0.0
          %1608 = vmatpush1.msra.mxu0 0.0
          %1609 = vmatprep.subr.mxu0 0.0
          %1610 = vmatpush1.msra.mxu0 0.0
          %1611 = vmatprep.subr.mxu0 0.0
          %1612 = vmatpush1.msra.mxu0 0.0
          %1613 = vmatprep.subr.mxu0 0.0
          %1614 = vmatpush1.msra.mxu0 0.0
          %1615 = vmatprep.subr.mxu0 0.0
          %1616 = vmatpush1.msra.mxu0 0.0
          %1617 = vmatprep.subr.mxu0 0.0
          %1618 = vmatpush1.msra.mxu0 0.0
          %1619 = vmatprep.subr.mxu0 0.0
          %1620 = vmatpush1.msra.mxu0 0.0
          %1621 = vmatprep.subr.mxu0 0.0
          %1622 = vmatpush1.msra.mxu0 0.0
          %1623 = vmatprep.subr.mxu0 0.0
          %1624 = vmatpush1.msra.mxu0 0.0
          %1625 = vmatprep.subr.mxu0 0.0
          %1626 = vmatpush1.msra.mxu0 0.0
          %1627 = vmatprep.subr.mxu0 0.0
          %1628 = vmatpush1.msra.mxu0 0.0
          %1629 = vmatprep.subr.mxu0 0.0
          %1630 = vmatpush1.msra.mxu0 0.0
          %1631 = vmatprep.subr.mxu0 0.0
          %1632 = vmatpush1.msra.mxu0 0.0
          %1633 = vmatprep.subr.mxu0 0.0
          %1634 = vmatpush1.msra.mxu0 0.0
          %1635 = vmatprep.subr.mxu0 0.0
          %1636 = vmatpush1.msra.mxu0 0.0
          %1637 = vmatprep.subr.mxu0 0.0
          %1638 = vmatpush1.msra.mxu0 0.0
          %1639 = vmatprep.subr.mxu0 0.0
          %1640 = vmatpush1.msra.mxu0 0.0
          %1641 = vmatprep.subr.mxu0 0.0
          %1642 = vmatpush1.msra.mxu0 0.0
          %1643 = vmatprep.subr.mxu0 0.0
          %1644 = vmatpush1.msra.mxu0 0.0
          %1645 = vmatprep.subr.mxu0 0.0
          %1646 = vmatpush1.msra.mxu0 0.0
          %1647 = vmatprep.subr.mxu0 0.0
          %1648 = vmatpush1.msra.mxu0 0.0
          %1649 = vmatprep.mubr.f32.mxu0 0.0
          %1650 = vmatmul.mubr.f32.gmra.mrb[0].mxu0 %v1538
          %v1651 = vpop.f32.mrb[0].mxu0
          %v1652 = vadd.f32 0.0, %v1651
          %v1653 = vpop.f32.mrb[0].mxu0
          %1654 = vmatprep.mubr.f32.mxu0 0.0
          %1655 = vmatmul.mubr.f32.gmra.mrb[0].mxu0 %v1541
          %v1656 = vpop.f32.mrb[0].mxu0
          %v1657 = vadd.f32 0.0, %v1656
          %v1658 = vpop.f32.mrb[0].mxu0
          %1659 = vmatprep.mubr.f32.mxu0 0.0
          %1660 = vmatmul.mubr.f32.gmra.mrb[0].mxu0 %v1544
          %v1661 = vpop.f32.mrb[0].mxu0
          %v1662 = vadd.f32 0.0, %v1661
          %v1663 = vpop.f32.mrb[0].mxu0
          %1664 = vmatprep.mubr.f32.mxu0 0.0
          %1665 = vmatmul.mubr.f32.gmra.mrb[0].mxu0 %v1547
          %v1666 = vpop.f32.mrb[0].mxu0
          %v1667 = vadd.f32 0.0, %v1666
          %v1668 = vpop.f32.mrb[0].mxu0
          %1669 = vmatprep.mubr.f32.mxu0 0.0
          %1670 = vmatmul.mubr.f32.gmra.mrb[0].mxu0 %v1550
          %v1671 = vpop.f32.mrb[0].mxu0
          %v1672 = vadd.f32 0.0, %v1671
          %v1673 = vpop.f32.mrb[0].mxu0
          %1674 = vmatprep.mubr.f32.mxu0 0.0
          %1675 = vmatmul.mubr.f32.gmra.mrb[0].mxu0 %v1553
          %v1676 = vpop.f32.mrb[0].mxu0
          %v1677 = vadd.f32 0.0, %v1676
          %v1678 = vpop.f32.mrb[0].mxu0
          %1679 = vmatprep.mubr.f32.mxu0 0.0
          %1680 = vmatmul.mubr.f32.gmra.mrb[0].mxu0 %v1556
          %v1681 = vpop.f32.mrb[0].mxu0
          %v1682 = vadd.f32 0.0, %v1681
          %v1683 = vpop.f32.mrb[0].mxu0
          %1684 = vmatprep.mubr.f32.mxu0 0.0
          %1685 = vmatmul.mubr.f32.gmra.mrb[0].mxu0 %v1559
          %v1686 = vpop.f32.mrb[0].mxu0
          %v1687 = vadd.f32 0.0, %v1686
          %v1688 = vpop.f32.mrb[0].mxu0
          %1689 = vmatprep.mubr.f32.mxu0 0.0
          %1690 = vmatmul.mubr.f32.gmra.mrb[0].mxu0 %v1562
          %v1691 = vpop.f32.mrb[0].mxu0
          %v1692 = vadd.f32 0.0, %v1691
          %v1693 = vpop.f32.mrb[0].mxu0
          %1694 = vmatprep.mubr.f32.mxu0 0.0
          %1695 = vmatmul.mubr.f32.gmra.mrb[0].mxu0 %v1565
          %v1696 = vpop.f32.mrb[0].mxu0
          %v1697 = vadd.f32 0.0, %v1696
          %v1698 = vpop.f32.mrb[0].mxu0
          %1699 = vmatprep.mubr.f32.mxu0 0.0
          %1700 = vmatmul.mubr.f32.gmra.mrb[0].mxu0 %v1568
          %v1701 = vpop.f32.mrb[0].mxu0
          %v1702 = vadd.f32 0.0, %v1701
          %v1703 = vpop.f32.mrb[0].mxu0
          %1704 = vmatprep.mubr.f32.mxu0 0.0
          %1705 = vmatmul.mubr.f32.gmra.mrb[0].mxu0 %v1571
          %v1706 = vpop.f32.mrb[0].mxu0
          %v1707 = vadd.f32 0.0, %v1706
          %v1708 = vpop.f32.mrb[0].mxu0
          %1709 = vmatprep.mubr.f32.mxu0 0.0
          %1710 = vmatmul.mubr.f32.gmra.mrb[0].mxu0 %v1574
          %v1711 = vpop.f32.mrb[0].mxu0
          %v1712 = vadd.f32 0.0, %v1711
          %v1713 = vpop.f32.mrb[0].mxu0
          %1714 = vmatprep.mubr.f32.mxu0 0.0
          %1715 = vmatmul.mubr.f32.gmra.mrb[0].mxu0 %v1577
          %v1716 = vpop.f32.mrb[0].mxu0
          %v1717 = vadd.f32 0.0, %v1716
          %v1718 = vpop.f32.mrb[0].mxu0
          %1719 = vmatprep.mubr.f32.mxu0 0.0
          %1720 = vmatmul.mubr.f32.gmra.mrb[0].mxu0 %v1580
          %v1721 = vpop.f32.mrb[0].mxu0
          %v1722 = vadd.f32 0.0, %v1721
          %v1723 = vpop.f32.mrb[0].mxu0
          %1724 = vmatprep.mubr.f32.mxu0 0.0
          %1725 = vmatmul.mubr.f32.gmra.mrb[0].mxu0 %v1583
          %v1726 = vpop.f32.mrb[0].mxu0
          %v1727 = vadd.f32 0.0, %v1726
          %v1728 = vpop.f32.mrb[0].mxu0
          %1729 = vdwg.mxu0
          %v1730 = vpack.c.bf16 %v1657, %v1652
          %v1731 = vpack.c.bf16 %v1667, %v1662
          %v1732 = vpack.c.bf16 %v1677, %v1672
          %v1733 = vpack.c.bf16 %v1687, %v1682
          %v1734 = vpack.c.bf16 %v1697, %v1692
          %v1735 = vpack.c.bf16 %v1707, %v1702
          %v1736 = vpack.c.bf16 %v1717, %v1712
          %v1737 = vpack.c.bf16 %v1727, %v1722
          %v1746 = vunpack.c.l.b16 %v1730
          %v1747 = vunpack.c.h.b16 %v1730
          %v1748 = vunpack.c.l.b16 %v1731
          %v1749 = vunpack.c.h.b16 %v1731
          %v1750 = vunpack.c.l.b16 %v1732
          %v1751 = vunpack.c.h.b16 %v1732
          %v1752 = vunpack.c.l.b16 %v1733
          %v1753 = vunpack.c.h.b16 %v1733
          %v1754 = vunpack.c.l.b16 %v1734
          %v1755 = vunpack.c.h.b16 %v1734
          %v1756 = vunpack.c.l.b16 %v1735
          %v1757 = vunpack.c.h.b16 %v1735
          %v1758 = vunpack.c.l.b16 %v1736
          %v1759 = vunpack.c.h.b16 %v1736
          %v1760 = vunpack.c.l.b16 %v1737
          %v1761 = vunpack.c.h.b16 %v1737
          %v1762 = vpack.c.b16 %v1746, %v1746
          %v1763 = vpack.c.b16 %v1747, %v1747
          %v1764 = vpack.c.b16 %v1748, %v1748
          %v1765 = vpack.c.b16 %v1749, %v1749
          %v1766 = vpack.c.b16 %v1750, %v1750
          %v1767 = vpack.c.b16 %v1751, %v1751
          %v1768 = vpack.c.b16 %v1752, %v1752
          %v1769 = vpack.c.b16 %v1753, %v1753
          %v1770 = vpack.c.b16 %v1754, %v1754
          %v1771 = vpack.c.b16 %v1755, %v1755
          %v1772 = vpack.c.b16 %v1756, %v1756
          %v1773 = vpack.c.b16 %v1757, %v1757
          %v1774 = vpack.c.b16 %v1758, %v1758
          %v1775 = vpack.c.b16 %v1759, %v1759
          %v1776 = vpack.c.b16 %v1760, %v1760
          %v1777 = vpack.c.b16 %v1761, %v1761
          %vm1794 = vcmask 125952
          %1795 = vst.msk [vmem:[%s531] sm:$0xf] %vm1794, %v1762
          %1796 = vst.msk [vmem:[%s531 + $0x4] sm:$0xf] %vm1794, %v1763
          %1797 = vst.msk [vmem:[%s531 + $0x8] sm:$0xf] %vm1794, %v1764
          %1798 = vst.msk [vmem:[%s531 + $0xc] sm:$0xf] %vm1794, %v1765
          %1799 = vst.msk [vmem:[%s531 + $0x10] sm:$0xf] %vm1794, %v1766
          %1800 = vst.msk [vmem:[%s531 + $0x14] sm:$0xf] %vm1794, %v1767
          %1801 = vst.msk [vmem:[%s531 + $0x18] sm:$0xf] %vm1794, %v1768
          %1802 = vst.msk [vmem:[%s531 + $0x1c] sm:$0xf] %vm1794, %v1769
          %1803 = vst.msk [vmem:[%s531 + $0x20] sm:$0xf] %vm1794, %v1770
          %1804 = vst.msk [vmem:[%s531 + $0x24] sm:$0xf] %vm1794, %v1771
          %1805 = vst.msk [vmem:[%s531 + $0x28] sm:$0xf] %vm1794, %v1772
          %1806 = vst.msk [vmem:[%s531 + $0x2c] sm:$0xf] %vm1794, %v1773
          %1807 = vst.msk [vmem:[%s531 + $0x30] sm:$0xf] %vm1794, %v1774
          %1808 = vst.msk [vmem:[%s531 + $0x34] sm:$0xf] %vm1794, %v1775
          %1809 = vst.msk [vmem:[%s531 + $0x38] sm:$0xf] %vm1794, %v1776
          %1810 = vst.msk [vmem:[%s531 + $0x3c] sm:$0xf] %vm1794, %v1777
        $region101: #{tpu_custom_call.1} parent=88 // pred_fallthru
          _
        %s1811 = smul.u32 16, %s25
        %p1812 = scmp.lt.s32.totalorder %s1811, 31
        %s1813 = scalar_select %p1812, %s1811, 31
        %s1814 = smul.addr %s1813, 8
        %s1815 = scalar_lea.vmem %s8, %s1814
        %s1816 = smul.u32 16, %s25
        %p1817 = scmp.lt.s32.totalorder %s1816, 31
        %s1818 = scalar_select %p1817, %s1816, 31
        %s1819 = smul.addr %s1818, 4
        %s1820 = scalar_lea.vmem %s9, %s1819
        // Predicated region
        $region102: #{tpu_custom_call.1} parent=88 // pred_check
          %p1821 = pneg %p241
        $region103: #{tpu_custom_call.1} parent=88 // pred_check_branch
          %1823 = sbr.rel (%p1821) target = $region105
        $region104: #{tpu_custom_call.1} parent=88 // pred_region
          %s1824 = smul.u32 16, %s25
        $region105: #{tpu_custom_call.1} parent=88 // pred_fallthru
          _
        // Predicated region
        $region106: #{tpu_custom_call.1} parent=88 // pred_check
          %p1825 = pneg %p267
        $region107: #{tpu_custom_call.1} parent=88 // pred_check_branch
          %1827 = sbr.rel (%p1825) target = $region109
        $region108: #{tpu_custom_call.1} parent=88 // pred_region
          %s1828 = smul.u32 16, %s25
        $region109: #{tpu_custom_call.1} parent=88 // pred_fallthru
          _
      $region89: #{tpu_custom_call.1} parent=5 // pred_fallthru
        _
      %p1829 = scmp.le.s32.totalorder 2, %s16
      // Predicated region
      $region110: #{tpu_custom_call.1} parent=5 // pred_check
        %p1830 = pneg %p1829
      $region111: #{tpu_custom_call.1} parent=5 // pred_check_branch
        %1832 = sbr.rel (%p1830) target = $region113
      $region112: #{tpu_custom_call.1} parent=5 // pred_region
        %s1833 = ssub.s32 %s16, 2
        // Predicated region
        $region114: #{tpu_custom_call.1} parent=112 // pred_check
          %p1834 = pneg %p247
        $region115: #{tpu_custom_call.1} parent=112 // pred_check_branch
          %1836 = sbr.rel (%p1834) target = $region117
        $region116: #{tpu_custom_call.1} parent=112 // pred_region
          %s1837 = smul.u32 16, %s27
          %p1838 = scmp.lt.s32.totalorder %s1837, 31
          %s1839 = scalar_select %p1838, %s1837, 31
          %s1840 = smul.addr %s1839, 8
          %s1841 = scalar_lea.vmem %s8, %s1840
        $region117: #{tpu_custom_call.1} parent=112 // pred_fallthru
          _
        // Predicated region
        $region118: #{tpu_custom_call.1} parent=112 // pred_check
          %p1842 = pneg %p273
        $region119: #{tpu_custom_call.1} parent=112 // pred_check_branch
          %1844 = sbr.rel (%p1842) target = $region121
        $region120: #{tpu_custom_call.1} parent=112 // pred_region
          %s1845 = smul.u32 16, %s27
          %p1846 = scmp.lt.s32.totalorder %s1845, 31
          %s1847 = scalar_select %p1846, %s1845, 31
          %s1848 = smul.addr %s1847, 4
          %s1849 = scalar_lea.vmem %s9, %s1848
        $region121: #{tpu_custom_call.1} parent=112 // pred_fallthru
          _
      $region113: #{tpu_custom_call.1} parent=5 // pred_fallthru
        _
    $region6: #{tpu_custom_call.1} parent=1 // loop_footer
      %s20 = sadd.s32 1, %s16
    $region7: #{tpu_custom_call.1} parent=1 // loop_footer_branch
      %15 = sbr.rel target = $region3
    $region8: #{tpu_custom_call.1} parent=1 // loop_exit
      _

</llo_original>
